<compile_context>
chip_gen: v5e
topology: v5e:2x2
jax: 0.10.0
libtpu: 0.0.40
codegen_flags: <defaults>
</compile_context>

<pallas_src>
import math

import jax
import jax.numpy as jnp
from jax.experimental import pallas as pl
from jax.experimental.pallas import tpu as pltpu

EPS = 1e-5

# Per-input-tensor size above which we switch from the gridless fully-resident
# path to a row-tiled pipelined grid.
_TILED_THRESHOLD_BYTES = 4 * 1024 * 1024
_TILE_ROWS = 1024  # multiple of 8 sublanes; full lane width per block


def add_layernorm_kernel(x_ref, y_ref, g_ref, b_ref, o_ref):
    # x_ref, y_ref, o_ref: (rows, C); g_ref, b_ref: (1, C).
    s = (x_ref[...] + y_ref[...]).astype(jnp.float32)
    c_inv = 1.0 / s.shape[-1]

    # Two-pass mean/variance: robust against catastrophic cancellation when
    # |mean| >> std (post-residual activations).  Kernel is HBM-bound, so the
    # extra lane reduction is hidden under the DMAs.
    mean = jnp.sum(s, axis=-1, keepdims=True) * c_inv
    centered = s - mean
    var = jnp.sum(centered * centered, axis=-1, keepdims=True) * c_inv
    inv = jax.lax.rsqrt(var + EPS)  # EUP slot (cheap)

    gamma = g_ref[...].astype(jnp.float32)
    beta = b_ref[...].astype(jnp.float32)
    o_ref[...] = (centered * inv * gamma + beta).astype(o_ref.dtype)


def add_layernorm(x379, x386, gamma, beta):
    orig_shape = x379.shape
    C = orig_shape[-1]
    N = math.prod(orig_shape[:-1])

    x2d = x379.reshape(N, C)
    y2d = x386.reshape(N, C)
    # gamma/beta as two separate tiny (1, C) VMEM operands: two small DMAs are
    # cheaper than an extra per-call stack/concat fusion.
    g2d = gamma.reshape(1, C).astype(x379.dtype)
    b2d = beta.reshape(1, C).astype(x379.dtype)

    itemsize = jnp.dtype(x2d.dtype).itemsize
    cost = pl.CostEstimate(
        flops=7 * N * C,
        transcendentals=N,
        bytes_accessed=(3 * N * C + 2 * C) * itemsize,
    )

    input_bytes = N * C * itemsize

    if input_bytes <= _TILED_THRESHOLD_BYTES or N <= _TILE_ROWS:
        # Small problem: one gridless block fully resident in VMEM.
        out2d = pl.pallas_call(
            add_layernorm_kernel,
            out_shape=jax.ShapeDtypeStruct((N, C), x379.dtype),
            in_specs=[
                pl.BlockSpec(memory_space=pltpu.MemorySpace.VMEM),
                pl.BlockSpec(memory_space=pltpu.MemorySpace.VMEM),
                pl.BlockSpec(memory_space=pltpu.MemorySpace.VMEM),
                pl.BlockSpec(memory_space=pltpu.MemorySpace.VMEM),
            ],
            out_specs=pl.BlockSpec(memory_space=pltpu.MemorySpace.VMEM),
            cost_estimate=cost,
        )(x2d, y2d, g2d, b2d)
    else:
        # Large problem: row-tiled pipelined grid; bounded VMEM footprint,
        # DMA/compute overlap, megacore sharding via "parallel" rows.
        tile_rows = _TILE_ROWS
        out2d = pl.pallas_call(
            add_layernorm_kernel,
            out_shape=jax.ShapeDtypeStruct((N, C), x379.dtype),
            grid=(pl.cdiv(N, tile_rows),),
            in_specs=[
                pl.BlockSpec((tile_rows, C), lambda i: (i, 0)),
                pl.BlockSpec((tile_rows, C), lambda i: (i, 0)),
                pl.BlockSpec((1, C), lambda i: (0, 0)),
                pl.BlockSpec((1, C), lambda i: (0, 0)),
            ],
            out_specs=pl.BlockSpec((tile_rows, C), lambda i: (i, 0)),
            compiler_params=pltpu.CompilerParams(
                dimension_semantics=("parallel",)),
            cost_estimate=cost,
        )(x2d, y2d, g2d, b2d)

    return out2d.reshape(orig_shape)


def reference(x379, x386, gamma, beta):
    s = (x379 + x386).astype(jnp.float32)
    mean = jnp.mean(s, axis=-1, keepdims=True)
    var = jnp.mean((s - mean) ** 2, axis=-1, keepdims=True)
    return ((s - mean) * jax.lax.rsqrt(var + EPS) * gamma + beta).astype(x379.dtype)


if __name__ == "__main__":
    key = jax.random.PRNGKey(0)
    k1, k2 = jax.random.split(key)

    # Spec shape: [1, 14, 14, 512] (exercises the gridless small-size path).
    B, H, W, C = 1, 14, 14, 512
    x379 = jax.random.normal(k1, (B, H, W, C), dtype=jnp.float32)
    x386 = jax.random.normal(k2, (B, H, W, C), dtype=jnp.float32)

    # Deterministic, nontrivial LayerNorm affine params.
    gamma = 1.0 + 0.01 * jnp.arange(C, dtype=jnp.float32)
    beta = 0.001 * jnp.arange(C, dtype=jnp.float32)

    ref = reference(x379, x386, gamma, beta)
    out = add_layernorm(x379, x386, gamma, beta)
    jax.block_until_ready(out)
    assert out.shape == (B, H, W, C)
    assert jnp.allclose(out, ref, atol=1e-4, rtol=1e-4), "mismatch vs reference (small)"

    # Larger batch to exercise the row-tiled grid path (N = 3136 > threshold).
    Bl = 16
    xl1 = jax.random.normal(k1, (Bl, H, W, C), dtype=jnp.float32)
    xl2 = jax.random.normal(k2, (Bl, H, W, C), dtype=jnp.float32)
    ref_l = reference(xl1, xl2, gamma, beta)
    out_l = add_layernorm(xl1, xl2, gamma, beta)
    jax.block_until_ready(out_l)
    assert jnp.allclose(out_l, ref_l, atol=1e-4, rtol=1e-4), "mismatch vs reference (tiled)"

    print("KERNEL_OK")
</pallas_src>

<mosaic_0001>
module attributes {stable_mosaic.version = 11 : i64} {
  func.func @add_layernorm_kernel(%arg0: memref<196x512xf32, #tpu.memory_space<vmem>>, %arg1: memref<196x512xf32, #tpu.memory_space<vmem>>, %arg2: memref<1x512xf32, #tpu.memory_space<vmem>>, %arg3: memref<1x512xf32, #tpu.memory_space<vmem>>, %arg4: memref<196x512xf32, #tpu.memory_space<vmem>>) attributes {dimension_semantics = [], scalar_prefetch = 0 : i64, scratch_operands = 0 : i64, tpu.core_type = #tpu.core_type<tc>} {
    %c0 = arith.constant 0 : index
    %c0_0 = arith.constant 0 : index
    %0 = vector.load %arg0[%c0, %c0_0] : memref<196x512xf32, #tpu.memory_space<vmem>>, vector<196x512xf32>
    %c0_1 = arith.constant 0 : index
    %c0_2 = arith.constant 0 : index
    %1 = vector.load %arg1[%c0_1, %c0_2] : memref<196x512xf32, #tpu.memory_space<vmem>>, vector<196x512xf32>
    %2 = arith.addf %0, %1 : vector<196x512xf32>
    %cst = arith.constant dense<0.000000e+00> : vector<196xf32>
    %3 = vector.multi_reduction <add>, %2, %cst [1] : vector<196x512xf32> to vector<196xf32>
    %4 = vector.shape_cast %3 : vector<196xf32> to vector<196x1xf32>
    %cst_3 = arith.constant 0.001953125 : f32
    %5 = vector.broadcast %cst_3 : f32 to vector<196x1xf32>
    %6 = arith.mulf %4, %5 : vector<196x1xf32>
    %7 = vector.broadcast %6 : vector<196x1xf32> to vector<196x512xf32>
    %8 = arith.subf %2, %7 : vector<196x512xf32>
    %9 = arith.mulf %8, %8 : vector<196x512xf32>
    %cst_4 = arith.constant dense<0.000000e+00> : vector<196xf32>
    %10 = vector.multi_reduction <add>, %9, %cst_4 [1] : vector<196x512xf32> to vector<196xf32>
    %11 = vector.shape_cast %10 : vector<196xf32> to vector<196x1xf32>
    %cst_5 = arith.constant 0.001953125 : f32
    %12 = vector.broadcast %cst_5 : f32 to vector<196x1xf32>
    %13 = arith.mulf %11, %12 : vector<196x1xf32>
    %cst_6 = arith.constant 9.99999974E-6 : f32
    %14 = vector.broadcast %cst_6 : f32 to vector<196x1xf32>
    %15 = arith.addf %13, %14 : vector<196x1xf32>
    %16 = math.rsqrt %15 : vector<196x1xf32>
    %c0_7 = arith.constant 0 : index
    %c0_8 = arith.constant 0 : index
    %17 = vector.load %arg2[%c0_7, %c0_8] : memref<1x512xf32, #tpu.memory_space<vmem>>, vector<1x512xf32>
    %c0_9 = arith.constant 0 : index
    %c0_10 = arith.constant 0 : index
    %18 = vector.load %arg3[%c0_9, %c0_10] : memref<1x512xf32, #tpu.memory_space<vmem>>, vector<1x512xf32>
    %19 = vector.broadcast %16 : vector<196x1xf32> to vector<196x512xf32>
    %20 = arith.mulf %8, %19 : vector<196x512xf32>
    %21 = vector.broadcast %17 : vector<1x512xf32> to vector<196x512xf32>
    %22 = arith.mulf %20, %21 : vector<196x512xf32>
    %23 = vector.broadcast %18 : vector<1x512xf32> to vector<196x512xf32>
    %24 = arith.addf %22, %23 : vector<196x512xf32>
    %c0_11 = arith.constant 0 : index
    %c0_12 = arith.constant 0 : index
    %25 = vector.load %arg4[%c0_11, %c0_12] : memref<196x512xf32, #tpu.memory_space<vmem>>, vector<196x512xf32>
    tpu.vector_store %arg4[%c0_11, %c0_12], %24 {strides = array<i32>} : memref<196x512xf32, #tpu.memory_space<vmem>>, vector<196x512xf32>,
    return
  }
}

</mosaic_0001>

<llo_original>
// kernel: tpu_custom_call.1
$region0: #{tpu_custom_call.1}
  #allocation0 [shape = 'u32[]', space=smem, size = 0x4, offset = 0x4, fixed_abs, tag = 'smem constant byte address 0x4 - core index']
  #allocation1 [shape = 'u32[72,128]{1,0:T(1,128)}', space=vmem, size = 0x9000, scoped, tag = 'internal scratch']
  %s0 = inlined_call_operand.hbm [shape: f32[196,512], index: 0, kind: input, shape index: {}]
  %s1 = inlined_call_operand.hbm [shape: f32[196,512], index: 1, kind: input, shape index: {}]
  %s2 = inlined_call_operand.hbm [shape: f32[1,512], index: 2, kind: input, shape index: {}]
  %s3 = inlined_call_operand.hbm [shape: f32[1,512], index: 3, kind: input, shape index: {}]
  %s4 = inlined_call_operand.hbm [shape: f32[196,512], index: 4, kind: output, shape index: {}]
  %s5 = sld [smem:[#allocation0]]
  $region42: #{tpu_custom_call.1} parent=0
    _
  %s7 = ssub.s32 1, %s5
  %s8 = scalar_select 0, %s7, %s5
  $region1: #{tpu_custom_call.1} parent=0
    #allocation2 [shape = 'u8[409600]{0}', space=vmem, size = 0x64000, scoped, tag = 'input window, operand 0, single buffered']
    #allocation3 [shape = 's32[1]{0}', space=sflag, size = 0x4, scoped, tag = 'scoped memory for tpu_custom_call.1']
    #allocation4 [shape = 's32[1]{0}', space=sflag, size = 0x4, scoped, tag = 'scoped memory for tpu_custom_call.1']
    #allocation5 [shape = 'u8[409600]{0}', space=vmem, size = 0x64000, scoped, tag = 'input window, operand 1, single buffered']
    #allocation6 [shape = 's32[1]{0}', space=sflag, size = 0x4, scoped, tag = 'scoped memory for tpu_custom_call.1']
    #allocation7 [shape = 'u8[2048]{0}', space=vmem, size = 0x800, scoped, tag = 'input window, operand 2, single buffered']
    #allocation8 [shape = 'u8[2048]{0}', space=vmem, size = 0x800, scoped, tag = 'input window, operand 3, single buffered']
    #allocation9 [shape = 's32[1]{0}', space=sflag, size = 0x4, scoped, tag = 'scoped memory for tpu_custom_call.1']
    #allocation10 [shape = 'u8[409600]{0}', space=vmem, size = 0x64000, scoped, tag = 'output window, operand 0, single buffered']
    %9 = vsyncpa [#allocation3], 0
    %10 = vsyncpa [#allocation6], 0
    %11 = vsyncpa [#allocation9], 0
    %12 = vsyncpa [#allocation4], 0
    // Predicated region
    $region2: #{tpu_custom_call.1} parent=1 // pred_check
      _
    $region3: #{tpu_custom_call.1} parent=1 // pred_check_branch
      %14 = sbr.rel (0) target = $region5
    $region4: #{tpu_custom_call.1} parent=1 // pred_region
      %16 = vsyncadd [#allocation3], 0
      %s17 = sshll.u32 %s0, 4
      %s18 = int_to_ptr.hbm [resolvable:$true] %s17
      %s19 = sshll.u32 [#allocation2], 4
      %s20 = int_to_ptr.vmem [resolvable:$true] %s19
      %25 = dma.hbm_to_vmem [thread:$0]  %s18, 12800, %s20, [#allocation3], 512, 512, 32
    $region5: #{tpu_custom_call.1} parent=1 // pred_fallthru
      _
    // Predicated region
    $region6: #{tpu_custom_call.1} parent=1 // pred_check
      _
    $region7: #{tpu_custom_call.1} parent=1 // pred_check_branch
      %27 = sbr.rel (0) target = $region9
    $region8: #{tpu_custom_call.1} parent=1 // pred_region
      %29 = vsyncadd [#allocation6], 0
      %s30 = sshll.u32 %s1, 4
      %s31 = int_to_ptr.hbm [resolvable:$true] %s30
      %s32 = sshll.u32 [#allocation5], 4
      %s33 = int_to_ptr.vmem [resolvable:$true] %s32
      %38 = dma.hbm_to_vmem [thread:$0]  %s31, 12800, %s33, [#allocation6], 512, 512, 32
    $region9: #{tpu_custom_call.1} parent=1 // pred_fallthru
      _
    // Predicated region
    $region10: #{tpu_custom_call.1} parent=1 // pred_check
      _
    $region11: #{tpu_custom_call.1} parent=1 // pred_check_branch
      %40 = sbr.rel (0) target = $region13
    $region12: #{tpu_custom_call.1} parent=1 // pred_region
      %42 = vsyncadd [#allocation6], 0
      %s44 = sshll.u32 %s2, 4
      %s45 = int_to_ptr.hbm [resolvable:$true] %s44
      %s46 = sshll.u32 [#allocation7], 4
      %s47 = int_to_ptr.vmem [resolvable:$true] %s46
      %49 = dma.hbm_to_vmem [thread:$0]  %s45, 64, %s47, [#allocation6]
    $region13: #{tpu_custom_call.1} parent=1 // pred_fallthru
      _
    // Predicated region
    $region14: #{tpu_custom_call.1} parent=1 // pred_check
      _
    $region15: #{tpu_custom_call.1} parent=1 // pred_check_branch
      %51 = sbr.rel (0) target = $region17
    $region16: #{tpu_custom_call.1} parent=1 // pred_region
      %53 = vsyncadd [#allocation9], 0
      %s55 = sshll.u32 %s3, 4
      %s56 = int_to_ptr.hbm [resolvable:$true] %s55
      %s57 = sshll.u32 [#allocation8], 4
      %s58 = int_to_ptr.vmem [resolvable:$true] %s57
      %60 = dma.hbm_to_vmem [thread:$0]  %s56, 64, %s58, [#allocation9]
    $region17: #{tpu_custom_call.1} parent=1 // pred_fallthru
      _
    // Predicated region
    $region18: #{tpu_custom_call.1} parent=1 // pred_check
      _
    $region19: #{tpu_custom_call.1} parent=1 // pred_check_branch
      %62 = sbr.rel (0) target = $region21
    $region20: #{tpu_custom_call.1} parent=1 // pred_region
      %64 = dma.done [#allocation3], 12800
    $region21: #{tpu_custom_call.1} parent=1 // pred_fallthru
      _
    // Predicated region
    $region22: #{tpu_custom_call.1} parent=1 // pred_check
      _
    $region23: #{tpu_custom_call.1} parent=1 // pred_check_branch
      %66 = sbr.rel (0) target = $region25
    $region24: #{tpu_custom_call.1} parent=1 // pred_region
      %68 = dma.done [#allocation6], 12800
    $region25: #{tpu_custom_call.1} parent=1 // pred_fallthru
      _
    // Predicated region
    $region26: #{tpu_custom_call.1} parent=1 // pred_check
      _
    $region27: #{tpu_custom_call.1} parent=1 // pred_check_branch
      %70 = sbr.rel (0) target = $region29
    $region28: #{tpu_custom_call.1} parent=1 // pred_region
      %72 = dma.done [#allocation6], 64
    $region29: #{tpu_custom_call.1} parent=1 // pred_fallthru
      _
    // Predicated region
    $region30: #{tpu_custom_call.1} parent=1 // pred_check
      _
    $region31: #{tpu_custom_call.1} parent=1 // pred_check_branch
      %74 = sbr.rel (0) target = $region33
    $region32: #{tpu_custom_call.1} parent=1 // pred_region
      %76 = dma.done [#allocation9], 64
    $region33: #{tpu_custom_call.1} parent=1 // pred_fallthru
      _
    %v77 = vld [vmem:[#allocation2] sm:$0xff]
    %v78 = vld [vmem:[#allocation2 + $0x8] sm:$0xff]
    %v79 = vld [vmem:[#allocation2 + $0x10] sm:$0xff]
    %v80 = vld [vmem:[#allocation2 + $0x18] sm:$0xff]
    %v81 = vld [vmem:[#allocation2 + $0x20] sm:$0xff]
    %v82 = vld [vmem:[#allocation2 + $0x28] sm:$0xff]
    %v83 = vld [vmem:[#allocation2 + $0x30] sm:$0xff]
    %v84 = vld [vmem:[#allocation2 + $0x38] sm:$0xff]
    %v85 = vld [vmem:[#allocation2 + $0x40] sm:$0xff]
    %v86 = vld [vmem:[#allocation2 + $0x48] sm:$0xff]
    %v87 = vld [vmem:[#allocation2 + $0x50] sm:$0xff]
    %v88 = vld [vmem:[#allocation2 + $0x58] sm:$0xff]
    %v89 = vld [vmem:[#allocation2 + $0x60] sm:$0xff]
    %v90 = vld [vmem:[#allocation2 + $0x68] sm:$0xff]
    %v91 = vld [vmem:[#allocation2 + $0x70] sm:$0xff]
    %v92 = vld [vmem:[#allocation2 + $0x78] sm:$0xff]
    %v93 = vld [vmem:[#allocation2 + $0x80] sm:$0xff]
    %v94 = vld [vmem:[#allocation2 + $0x88] sm:$0xff]
    %v95 = vld [vmem:[#allocation2 + $0x90] sm:$0xff]
    %v96 = vld [vmem:[#allocation2 + $0x98] sm:$0xff]
    %v97 = vld [vmem:[#allocation2 + $0xa0] sm:$0xff]
    %v98 = vld [vmem:[#allocation2 + $0xa8] sm:$0xff]
    %v99 = vld [vmem:[#allocation2 + $0xb0] sm:$0xff]
    %v100 = vld [vmem:[#allocation2 + $0xb8] sm:$0xff]
    %v101 = vld [vmem:[#allocation2 + $0xc0] sm:$0xff]
    %v102 = vld [vmem:[#allocation2 + $0xc8] sm:$0xff]
    %v103 = vld [vmem:[#allocation2 + $0xd0] sm:$0xff]
    %v104 = vld [vmem:[#allocation2 + $0xd8] sm:$0xff]
    %v105 = vld [vmem:[#allocation2 + $0xe0] sm:$0xff]
    %v106 = vld [vmem:[#allocation2 + $0xe8] sm:$0xff]
    %v107 = vld [vmem:[#allocation2 + $0xf0] sm:$0xff]
    %v108 = vld [vmem:[#allocation2 + $0xf8] sm:$0xff]
    %v109 = vld [vmem:[#allocation2 + $0x100] sm:$0xff]
    %v110 = vld [vmem:[#allocation2 + $0x108] sm:$0xff]
    %v111 = vld [vmem:[#allocation2 + $0x110] sm:$0xff]
    %v112 = vld [vmem:[#allocation2 + $0x118] sm:$0xff]
    %v113 = vld [vmem:[#allocation2 + $0x120] sm:$0xff]
    %v114 = vld [vmem:[#allocation2 + $0x128] sm:$0xff]
    %v115 = vld [vmem:[#allocation2 + $0x130] sm:$0xff]
    %v116 = vld [vmem:[#allocation2 + $0x138] sm:$0xff]
    %v117 = vld [vmem:[#allocation2 + $0x140] sm:$0xff]
    %v118 = vld [vmem:[#allocation2 + $0x148] sm:$0xff]
    %v119 = vld [vmem:[#allocation2 + $0x150] sm:$0xff]
    %v120 = vld [vmem:[#allocation2 + $0x158] sm:$0xff]
    %v121 = vld [vmem:[#allocation2 + $0x160] sm:$0xff]
    %v122 = vld [vmem:[#allocation2 + $0x168] sm:$0xff]
    %v123 = vld [vmem:[#allocation2 + $0x170] sm:$0xff]
    %v124 = vld [vmem:[#allocation2 + $0x178] sm:$0xff]
    %v125 = vld [vmem:[#allocation2 + $0x180] sm:$0xff]
    %v126 = vld [vmem:[#allocation2 + $0x188] sm:$0xff]
    %v127 = vld [vmem:[#allocation2 + $0x190] sm:$0xff]
    %v128 = vld [vmem:[#allocation2 + $0x198] sm:$0xff]
    %v129 = vld [vmem:[#allocation2 + $0x1a0] sm:$0xff]
    %v130 = vld [vmem:[#allocation2 + $0x1a8] sm:$0xff]
    %v131 = vld [vmem:[#allocation2 + $0x1b0] sm:$0xff]
    %v132 = vld [vmem:[#allocation2 + $0x1b8] sm:$0xff]
    %v133 = vld [vmem:[#allocation2 + $0x1c0] sm:$0xff]
    %v134 = vld [vmem:[#allocation2 + $0x1c8] sm:$0xff]
    %v135 = vld [vmem:[#allocation2 + $0x1d0] sm:$0xff]
    %v136 = vld [vmem:[#allocation2 + $0x1d8] sm:$0xff]
    %v137 = vld [vmem:[#allocation2 + $0x1e0] sm:$0xff]
    %v138 = vld [vmem:[#allocation2 + $0x1e8] sm:$0xff]
    %v139 = vld [vmem:[#allocation2 + $0x1f0] sm:$0xff]
    %v140 = vld [vmem:[#allocation2 + $0x1f8] sm:$0xff]
    %v141 = vld [vmem:[#allocation2 + $0x200] sm:$0xff]
    %v142 = vld [vmem:[#allocation2 + $0x208] sm:$0xff]
    %v143 = vld [vmem:[#allocation2 + $0x210] sm:$0xff]
    %v144 = vld [vmem:[#allocation2 + $0x218] sm:$0xff]
    %v145 = vld [vmem:[#allocation2 + $0x220] sm:$0xff]
    %v146 = vld [vmem:[#allocation2 + $0x228] sm:$0xff]
    %v147 = vld [vmem:[#allocation2 + $0x230] sm:$0xff]
    %v148 = vld [vmem:[#allocation2 + $0x238] sm:$0xff]
    %v149 = vld [vmem:[#allocation2 + $0x240] sm:$0xff]
    %v150 = vld [vmem:[#allocation2 + $0x248] sm:$0xff]
    %v151 = vld [vmem:[#allocation2 + $0x250] sm:$0xff]
    %v152 = vld [vmem:[#allocation2 + $0x258] sm:$0xff]
    %v153 = vld [vmem:[#allocation2 + $0x260] sm:$0xff]
    %v154 = vld [vmem:[#allocation2 + $0x268] sm:$0xff]
    %v155 = vld [vmem:[#allocation2 + $0x270] sm:$0xff]
    %v156 = vld [vmem:[#allocation2 + $0x278] sm:$0xff]
    %v157 = vld [vmem:[#allocation2 + $0x280] sm:$0xff]
    %v158 = vld [vmem:[#allocation2 + $0x288] sm:$0xff]
    %v159 = vld [vmem:[#allocation2 + $0x290] sm:$0xff]
    %v160 = vld [vmem:[#allocation2 + $0x298] sm:$0xff]
    %v161 = vld [vmem:[#allocation2 + $0x2a0] sm:$0xff]
    %v162 = vld [vmem:[#allocation2 + $0x2a8] sm:$0xff]
    %v163 = vld [vmem:[#allocation2 + $0x2b0] sm:$0xff]
    %v164 = vld [vmem:[#allocation2 + $0x2b8] sm:$0xff]
    %v165 = vld [vmem:[#allocation2 + $0x2c0] sm:$0xff]
    %v166 = vld [vmem:[#allocation2 + $0x2c8] sm:$0xff]
    %v167 = vld [vmem:[#allocation2 + $0x2d0] sm:$0xff]
    %v168 = vld [vmem:[#allocation2 + $0x2d8] sm:$0xff]
    %v169 = vld [vmem:[#allocation2 + $0x2e0] sm:$0xff]
    %v170 = vld [vmem:[#allocation2 + $0x2e8] sm:$0xff]
    %v171 = vld [vmem:[#allocation2 + $0x2f0] sm:$0xff]
    %v172 = vld [vmem:[#allocation2 + $0x2f8] sm:$0xff]
    %v173 = vld [vmem:[#allocation2 + $0x300] sm:$0xf]
    %v174 = vld [vmem:[#allocation2 + $0x308] sm:$0xf]
    %v175 = vld [vmem:[#allocation2 + $0x310] sm:$0xf]
    %v176 = vld [vmem:[#allocation2 + $0x318] sm:$0xf]
    %v177 = vld [vmem:[#allocation5] sm:$0xff]
    %v178 = vld [vmem:[#allocation5 + $0x8] sm:$0xff]
    %v179 = vld [vmem:[#allocation5 + $0x10] sm:$0xff]
    %v180 = vld [vmem:[#allocation5 + $0x18] sm:$0xff]
    %v181 = vld [vmem:[#allocation5 + $0x20] sm:$0xff]
    %v182 = vld [vmem:[#allocation5 + $0x28] sm:$0xff]
    %v183 = vld [vmem:[#allocation5 + $0x30] sm:$0xff]
    %v184 = vld [vmem:[#allocation5 + $0x38] sm:$0xff]
    %v185 = vld [vmem:[#allocation5 + $0x40] sm:$0xff]
    %v186 = vld [vmem:[#allocation5 + $0x48] sm:$0xff]
    %v187 = vld [vmem:[#allocation5 + $0x50] sm:$0xff]
    %v188 = vld [vmem:[#allocation5 + $0x58] sm:$0xff]
    %v189 = vld [vmem:[#allocation5 + $0x60] sm:$0xff]
    %v190 = vld [vmem:[#allocation5 + $0x68] sm:$0xff]
    %v191 = vld [vmem:[#allocation5 + $0x70] sm:$0xff]
    %v192 = vld [vmem:[#allocation5 + $0x78] sm:$0xff]
    %v193 = vld [vmem:[#allocation5 + $0x80] sm:$0xff]
    %v194 = vld [vmem:[#allocation5 + $0x88] sm:$0xff]
    %v195 = vld [vmem:[#allocation5 + $0x90] sm:$0xff]
    %v196 = vld [vmem:[#allocation5 + $0x98] sm:$0xff]
    %v197 = vld [vmem:[#allocation5 + $0xa0] sm:$0xff]
    %v198 = vld [vmem:[#allocation5 + $0xa8] sm:$0xff]
    %v199 = vld [vmem:[#allocation5 + $0xb0] sm:$0xff]
    %v200 = vld [vmem:[#allocation5 + $0xb8] sm:$0xff]
    %v201 = vld [vmem:[#allocation5 + $0xc0] sm:$0xff]
    %v202 = vld [vmem:[#allocation5 + $0xc8] sm:$0xff]
    %v203 = vld [vmem:[#allocation5 + $0xd0] sm:$0xff]
    %v204 = vld [vmem:[#allocation5 + $0xd8] sm:$0xff]
    %v205 = vld [vmem:[#allocation5 + $0xe0] sm:$0xff]
    %v206 = vld [vmem:[#allocation5 + $0xe8] sm:$0xff]
    %v207 = vld [vmem:[#allocation5 + $0xf0] sm:$0xff]
    %v208 = vld [vmem:[#allocation5 + $0xf8] sm:$0xff]
    %v209 = vld [vmem:[#allocation5 + $0x100] sm:$0xff]
    %v210 = vld [vmem:[#allocation5 + $0x108] sm:$0xff]
    %v211 = vld [vmem:[#allocation5 + $0x110] sm:$0xff]
    %v212 = vld [vmem:[#allocation5 + $0x118] sm:$0xff]
    %v213 = vld [vmem:[#allocation5 + $0x120] sm:$0xff]
    %v214 = vld [vmem:[#allocation5 + $0x128] sm:$0xff]
    %v215 = vld [vmem:[#allocation5 + $0x130] sm:$0xff]
    %v216 = vld [vmem:[#allocation5 + $0x138] sm:$0xff]
    %v217 = vld [vmem:[#allocation5 + $0x140] sm:$0xff]
    %v218 = vld [vmem:[#allocation5 + $0x148] sm:$0xff]
    %v219 = vld [vmem:[#allocation5 + $0x150] sm:$0xff]
    %v220 = vld [vmem:[#allocation5 + $0x158] sm:$0xff]
    %v221 = vld [vmem:[#allocation5 + $0x160] sm:$0xff]
    %v222 = vld [vmem:[#allocation5 + $0x168] sm:$0xff]
    %v223 = vld [vmem:[#allocation5 + $0x170] sm:$0xff]
    %v224 = vld [vmem:[#allocation5 + $0x178] sm:$0xff]
    %v225 = vld [vmem:[#allocation5 + $0x180] sm:$0xff]
    %v226 = vld [vmem:[#allocation5 + $0x188] sm:$0xff]
    %v227 = vld [vmem:[#allocation5 + $0x190] sm:$0xff]
    %v228 = vld [vmem:[#allocation5 + $0x198] sm:$0xff]
    %v229 = vld [vmem:[#allocation5 + $0x1a0] sm:$0xff]
    %v230 = vld [vmem:[#allocation5 + $0x1a8] sm:$0xff]
    %v231 = vld [vmem:[#allocation5 + $0x1b0] sm:$0xff]
    %v232 = vld [vmem:[#allocation5 + $0x1b8] sm:$0xff]
    %v233 = vld [vmem:[#allocation5 + $0x1c0] sm:$0xff]
    %v234 = vld [vmem:[#allocation5 + $0x1c8] sm:$0xff]
    %v235 = vld [vmem:[#allocation5 + $0x1d0] sm:$0xff]
    %v236 = vld [vmem:[#allocation5 + $0x1d8] sm:$0xff]
    %v237 = vld [vmem:[#allocation5 + $0x1e0] sm:$0xff]
    %v238 = vld [vmem:[#allocation5 + $0x1e8] sm:$0xff]
    %v239 = vld [vmem:[#allocation5 + $0x1f0] sm:$0xff]
    %v240 = vld [vmem:[#allocation5 + $0x1f8] sm:$0xff]
    %v241 = vld [vmem:[#allocation5 + $0x200] sm:$0xff]
    %v242 = vld [vmem:[#allocation5 + $0x208] sm:$0xff]
    %v243 = vld [vmem:[#allocation5 + $0x210] sm:$0xff]
    %v244 = vld [vmem:[#allocation5 + $0x218] sm:$0xff]
    %v245 = vld [vmem:[#allocation5 + $0x220] sm:$0xff]
    %v246 = vld [vmem:[#allocation5 + $0x228] sm:$0xff]
    %v247 = vld [vmem:[#allocation5 + $0x230] sm:$0xff]
    %v248 = vld [vmem:[#allocation5 + $0x238] sm:$0xff]
    %v249 = vld [vmem:[#allocation5 + $0x240] sm:$0xff]
    %v250 = vld [vmem:[#allocation5 + $0x248] sm:$0xff]
    %v251 = vld [vmem:[#allocation5 + $0x250] sm:$0xff]
    %v252 = vld [vmem:[#allocation5 + $0x258] sm:$0xff]
    %v253 = vld [vmem:[#allocation5 + $0x260] sm:$0xff]
    %v254 = vld [vmem:[#allocation5 + $0x268] sm:$0xff]
    %v255 = vld [vmem:[#allocation5 + $0x270] sm:$0xff]
    %v256 = vld [vmem:[#allocation5 + $0x278] sm:$0xff]
    %v257 = vld [vmem:[#allocation5 + $0x280] sm:$0xff]
    %v258 = vld [vmem:[#allocation5 + $0x288] sm:$0xff]
    %v259 = vld [vmem:[#allocation5 + $0x290] sm:$0xff]
    %v260 = vld [vmem:[#allocation5 + $0x298] sm:$0xff]
    %v261 = vld [vmem:[#allocation5 + $0x2a0] sm:$0xff]
    %v262 = vld [vmem:[#allocation5 + $0x2a8] sm:$0xff]
    %v263 = vld [vmem:[#allocation5 + $0x2b0] sm:$0xff]
    %v264 = vld [vmem:[#allocation5 + $0x2b8] sm:$0xff]
    %v265 = vld [vmem:[#allocation5 + $0x2c0] sm:$0xff]
    %v266 = vld [vmem:[#allocation5 + $0x2c8] sm:$0xff]
    %v267 = vld [vmem:[#allocation5 + $0x2d0] sm:$0xff]
    %v268 = vld [vmem:[#allocation5 + $0x2d8] sm:$0xff]
    %v269 = vld [vmem:[#allocation5 + $0x2e0] sm:$0xff]
    %v270 = vld [vmem:[#allocation5 + $0x2e8] sm:$0xff]
    %v271 = vld [vmem:[#allocation5 + $0x2f0] sm:$0xff]
    %v272 = vld [vmem:[#allocation5 + $0x2f8] sm:$0xff]
    %v273 = vld [vmem:[#allocation5 + $0x300] sm:$0xf]
    %v274 = vld [vmem:[#allocation5 + $0x308] sm:$0xf]
    %v275 = vld [vmem:[#allocation5 + $0x310] sm:$0xf]
    %v276 = vld [vmem:[#allocation5 + $0x318] sm:$0xf]
    %v277 = vadd.f32 %v77, %v177
    %v278 = vadd.f32 %v78, %v178
    %v279 = vadd.f32 %v79, %v179
    %v280 = vadd.f32 %v80, %v180
    %v281 = vadd.f32 %v81, %v181
    %v282 = vadd.f32 %v82, %v182
    %v283 = vadd.f32 %v83, %v183
    %v284 = vadd.f32 %v84, %v184
    %v285 = vadd.f32 %v85, %v185
    %v286 = vadd.f32 %v86, %v186
    %v287 = vadd.f32 %v87, %v187
    %v288 = vadd.f32 %v88, %v188
    %v289 = vadd.f32 %v89, %v189
    %v290 = vadd.f32 %v90, %v190
    %v291 = vadd.f32 %v91, %v191
    %v292 = vadd.f32 %v92, %v192
    %v293 = vadd.f32 %v93, %v193
    %v294 = vadd.f32 %v94, %v194
    %v295 = vadd.f32 %v95, %v195
    %v296 = vadd.f32 %v96, %v196
    %v297 = vadd.f32 %v97, %v197
    %v298 = vadd.f32 %v98, %v198
    %v299 = vadd.f32 %v99, %v199
    %v300 = vadd.f32 %v100, %v200
    %v301 = vadd.f32 %v101, %v201
    %v302 = vadd.f32 %v102, %v202
    %v303 = vadd.f32 %v103, %v203
    %v304 = vadd.f32 %v104, %v204
    %v305 = vadd.f32 %v105, %v205
    %v306 = vadd.f32 %v106, %v206
    %v307 = vadd.f32 %v107, %v207
    %v308 = vadd.f32 %v108, %v208
    %v309 = vadd.f32 %v109, %v209
    %v310 = vadd.f32 %v110, %v210
    %v311 = vadd.f32 %v111, %v211
    %v312 = vadd.f32 %v112, %v212
    %v313 = vadd.f32 %v113, %v213
    %v314 = vadd.f32 %v114, %v214
    %v315 = vadd.f32 %v115, %v215
    %v316 = vadd.f32 %v116, %v216
    %v317 = vadd.f32 %v117, %v217
    %v318 = vadd.f32 %v118, %v218
    %v319 = vadd.f32 %v119, %v219
    %v320 = vadd.f32 %v120, %v220
    %v321 = vadd.f32 %v121, %v221
    %v322 = vadd.f32 %v122, %v222
    %v323 = vadd.f32 %v123, %v223
    %v324 = vadd.f32 %v124, %v224
    %v325 = vadd.f32 %v125, %v225
    %v326 = vadd.f32 %v126, %v226
    %v327 = vadd.f32 %v127, %v227
    %v328 = vadd.f32 %v128, %v228
    %v329 = vadd.f32 %v129, %v229
    %v330 = vadd.f32 %v130, %v230
    %v331 = vadd.f32 %v131, %v231
    %v332 = vadd.f32 %v132, %v232
    %v333 = vadd.f32 %v133, %v233
    %v334 = vadd.f32 %v134, %v234
    %v335 = vadd.f32 %v135, %v235
    %v336 = vadd.f32 %v136, %v236
    %v337 = vadd.f32 %v137, %v237
    %v338 = vadd.f32 %v138, %v238
    %v339 = vadd.f32 %v139, %v239
    %v340 = vadd.f32 %v140, %v240
    %v341 = vadd.f32 %v141, %v241
    %v342 = vadd.f32 %v142, %v242
    %v343 = vadd.f32 %v143, %v243
    %v344 = vadd.f32 %v144, %v244
    %v345 = vadd.f32 %v145, %v245
    %v346 = vadd.f32 %v146, %v246
    %v347 = vadd.f32 %v147, %v247
    %v348 = vadd.f32 %v148, %v248
    %v349 = vadd.f32 %v149, %v249
    %v350 = vadd.f32 %v150, %v250
    %v351 = vadd.f32 %v151, %v251
    %v352 = vadd.f32 %v152, %v252
    %v353 = vadd.f32 %v153, %v253
    %v354 = vadd.f32 %v154, %v254
    %v355 = vadd.f32 %v155, %v255
    %v356 = vadd.f32 %v156, %v256
    %v357 = vadd.f32 %v157, %v257
    %v358 = vadd.f32 %v158, %v258
    %v359 = vadd.f32 %v159, %v259
    %v360 = vadd.f32 %v160, %v260
    %v361 = vadd.f32 %v161, %v261
    %v362 = vadd.f32 %v162, %v262
    %v363 = vadd.f32 %v163, %v263
    %v364 = vadd.f32 %v164, %v264
    %v365 = vadd.f32 %v165, %v265
    %v366 = vadd.f32 %v166, %v266
    %v367 = vadd.f32 %v167, %v267
    %v368 = vadd.f32 %v168, %v268
    %v369 = vadd.f32 %v169, %v269
    %v370 = vadd.f32 %v170, %v270
    %v371 = vadd.f32 %v171, %v271
    %v372 = vadd.f32 %v172, %v272
    %v373 = vadd.f32 %v173, %v273
    %v374 = vadd.f32 %v174, %v274
    %v375 = vadd.f32 %v175, %v275
    %v376 = vadd.f32 %v176, %v276
    %v377 = vadd.f32 %v277, %v278
    %v378 = vadd.f32 %v377, %v279
    %v379 = vadd.f32 %v378, %v280
    %380 = vadd.xlane.f32.xlu0 %v379
    %v381 = vpop.xlane.xlu0 %380
    %v382 = vadd.f32 %v281, %v282
    %v383 = vadd.f32 %v382, %v283
    %v384 = vadd.f32 %v383, %v284
    %385 = vadd.xlane.f32.xlu0 %v384
    %v386 = vpop.xlane.xlu0 %385
    %v387 = vadd.f32 %v285, %v286
    %v388 = vadd.f32 %v387, %v287
    %v389 = vadd.f32 %v388, %v288
    %390 = vadd.xlane.f32.xlu0 %v389
    %v391 = vpop.xlane.xlu0 %390
    %v392 = vadd.f32 %v289, %v290
    %v393 = vadd.f32 %v392, %v291
    %v394 = vadd.f32 %v393, %v292
    %395 = vadd.xlane.f32.xlu0 %v394
    %v396 = vpop.xlane.xlu0 %395
    %v397 = vadd.f32 %v293, %v294
    %v398 = vadd.f32 %v397, %v295
    %v399 = vadd.f32 %v398, %v296
    %400 = vadd.xlane.f32.xlu0 %v399
    %v401 = vpop.xlane.xlu0 %400
    %v402 = vadd.f32 %v297, %v298
    %v403 = vadd.f32 %v402, %v299
    %v404 = vadd.f32 %v403, %v300
    %405 = vadd.xlane.f32.xlu0 %v404
    %v406 = vpop.xlane.xlu0 %405
    %v407 = vadd.f32 %v301, %v302
    %v408 = vadd.f32 %v407, %v303
    %v409 = vadd.f32 %v408, %v304
    %410 = vadd.xlane.f32.xlu0 %v409
    %v411 = vpop.xlane.xlu0 %410
    %v412 = vadd.f32 %v305, %v306
    %v413 = vadd.f32 %v412, %v307
    %v414 = vadd.f32 %v413, %v308
    %415 = vadd.xlane.f32.xlu0 %v414
    %v416 = vpop.xlane.xlu0 %415
    %v417 = vadd.f32 %v309, %v310
    %v418 = vadd.f32 %v417, %v311
    %v419 = vadd.f32 %v418, %v312
    %420 = vadd.xlane.f32.xlu0 %v419
    %v421 = vpop.xlane.xlu0 %420
    %v422 = vadd.f32 %v313, %v314
    %v423 = vadd.f32 %v422, %v315
    %v424 = vadd.f32 %v423, %v316
    %425 = vadd.xlane.f32.xlu0 %v424
    %v426 = vpop.xlane.xlu0 %425
    %v427 = vadd.f32 %v317, %v318
    %v428 = vadd.f32 %v427, %v319
    %v429 = vadd.f32 %v428, %v320
    %430 = vadd.xlane.f32.xlu0 %v429
    %v431 = vpop.xlane.xlu0 %430
    %v432 = vadd.f32 %v321, %v322
    %v433 = vadd.f32 %v432, %v323
    %v434 = vadd.f32 %v433, %v324
    %435 = vadd.xlane.f32.xlu0 %v434
    %v436 = vpop.xlane.xlu0 %435
    %v437 = vadd.f32 %v325, %v326
    %v438 = vadd.f32 %v437, %v327
    %v439 = vadd.f32 %v438, %v328
    %440 = vadd.xlane.f32.xlu0 %v439
    %v441 = vpop.xlane.xlu0 %440
    %v442 = vadd.f32 %v329, %v330
    %v443 = vadd.f32 %v442, %v331
    %v444 = vadd.f32 %v443, %v332
    %445 = vadd.xlane.f32.xlu0 %v444
    %v446 = vpop.xlane.xlu0 %445
    %v447 = vadd.f32 %v333, %v334
    %v448 = vadd.f32 %v447, %v335
    %v449 = vadd.f32 %v448, %v336
    %450 = vadd.xlane.f32.xlu0 %v449
    %v451 = vpop.xlane.xlu0 %450
    %v452 = vadd.f32 %v337, %v338
    %v453 = vadd.f32 %v452, %v339
    %v454 = vadd.f32 %v453, %v340
    %455 = vadd.xlane.f32.xlu0 %v454
    %v456 = vpop.xlane.xlu0 %455
    %v457 = vadd.f32 %v341, %v342
    %v458 = vadd.f32 %v457, %v343
    %v459 = vadd.f32 %v458, %v344
    %460 = vadd.xlane.f32.xlu0 %v459
    %v461 = vpop.xlane.xlu0 %460
    %v462 = vadd.f32 %v345, %v346
    %v463 = vadd.f32 %v462, %v347
    %v464 = vadd.f32 %v463, %v348
    %465 = vadd.xlane.f32.xlu0 %v464
    %v466 = vpop.xlane.xlu0 %465
    %v467 = vadd.f32 %v349, %v350
    %v468 = vadd.f32 %v467, %v351
    %v469 = vadd.f32 %v468, %v352
    %470 = vadd.xlane.f32.xlu0 %v469
    %v471 = vpop.xlane.xlu0 %470
    %v472 = vadd.f32 %v353, %v354
    %v473 = vadd.f32 %v472, %v355
    %v474 = vadd.f32 %v473, %v356
    %475 = vadd.xlane.f32.xlu0 %v474
    %v476 = vpop.xlane.xlu0 %475
    %v477 = vadd.f32 %v357, %v358
    %v478 = vadd.f32 %v477, %v359
    %v479 = vadd.f32 %v478, %v360
    %480 = vadd.xlane.f32.xlu0 %v479
    %v481 = vpop.xlane.xlu0 %480
    %v482 = vadd.f32 %v361, %v362
    %v483 = vadd.f32 %v482, %v363
    %v484 = vadd.f32 %v483, %v364
    %485 = vadd.xlane.f32.xlu0 %v484
    %v486 = vpop.xlane.xlu0 %485
    %v487 = vadd.f32 %v365, %v366
    %v488 = vadd.f32 %v487, %v367
    %v489 = vadd.f32 %v488, %v368
    %490 = vadd.xlane.f32.xlu0 %v489
    %v491 = vpop.xlane.xlu0 %490
    %v492 = vadd.f32 %v369, %v370
    %v493 = vadd.f32 %v492, %v371
    %v494 = vadd.f32 %v493, %v372
    %495 = vadd.xlane.f32.xlu0 %v494
    %v496 = vpop.xlane.xlu0 %495
    %vm497 = vcmask 1043456
    %v498 = vsel %vm497, %v373, 0.0
    %v499 = vsel %vm497, %v374, 0.0
    %v500 = vadd.f32 %v498, %v499
    %v501 = vsel %vm497, %v375, 0.0
    %v502 = vadd.f32 %v500, %v501
    %v503 = vsel %vm497, %v376, 0.0
    %v504 = vadd.f32 %v502, %v503
    %505 = vadd.xlane.f32.xlu0 %v504
    %v506 = vpop.xlane.xlu0 %505
    %v507 = vmul.f32 %v381, 0.001953125
    %v508 = vmul.f32 %v386, 0.001953125
    %v509 = vmul.f32 %v391, 0.001953125
    %v510 = vmul.f32 %v396, 0.001953125
    %v511 = vmul.f32 %v401, 0.001953125
    %v512 = vmul.f32 %v406, 0.001953125
    %v513 = vmul.f32 %v411, 0.001953125
    %v514 = vmul.f32 %v416, 0.001953125
    %v515 = vmul.f32 %v421, 0.001953125
    %v516 = vmul.f32 %v426, 0.001953125
    %v517 = vmul.f32 %v431, 0.001953125
    %v518 = vmul.f32 %v436, 0.001953125
    %v519 = vmul.f32 %v441, 0.001953125
    %v520 = vmul.f32 %v446, 0.001953125
    %v521 = vmul.f32 %v451, 0.001953125
    %v522 = vmul.f32 %v456, 0.001953125
    %v523 = vmul.f32 %v461, 0.001953125
    %v524 = vmul.f32 %v466, 0.001953125
    %v525 = vmul.f32 %v471, 0.001953125
    %v526 = vmul.f32 %v476, 0.001953125
    %v527 = vmul.f32 %v481, 0.001953125
    %v528 = vmul.f32 %v486, 0.001953125
    %v529 = vmul.f32 %v491, 0.001953125
    %v530 = vmul.f32 %v496, 0.001953125
    %v531 = vmul.f32 %v506, 0.001953125
    %v532 = vsub.f32 %v277, %v507
    %v533 = vsub.f32 %v278, %v507
    %v534 = vsub.f32 %v279, %v507
    %v535 = vsub.f32 %v280, %v507
    %v536 = vsub.f32 %v281, %v508
    %v537 = vsub.f32 %v282, %v508
    %v538 = vsub.f32 %v283, %v508
    %v539 = vsub.f32 %v284, %v508
    %v540 = vsub.f32 %v285, %v509
    %v541 = vsub.f32 %v286, %v509
    %v542 = vsub.f32 %v287, %v509
    %v543 = vsub.f32 %v288, %v509
    %v544 = vsub.f32 %v289, %v510
    %v545 = vsub.f32 %v290, %v510
    %v546 = vsub.f32 %v291, %v510
    %v547 = vsub.f32 %v292, %v510
    %v548 = vsub.f32 %v293, %v511
    %v549 = vsub.f32 %v294, %v511
    %v550 = vsub.f32 %v295, %v511
    %v551 = vsub.f32 %v296, %v511
    %v552 = vsub.f32 %v297, %v512
    %v553 = vsub.f32 %v298, %v512
    %v554 = vsub.f32 %v299, %v512
    %v555 = vsub.f32 %v300, %v512
    %v556 = vsub.f32 %v301, %v513
    %v557 = vsub.f32 %v302, %v513
    %v558 = vsub.f32 %v303, %v513
    %v559 = vsub.f32 %v304, %v513
    %v560 = vsub.f32 %v305, %v514
    %v561 = vsub.f32 %v306, %v514
    %v562 = vsub.f32 %v307, %v514
    %v563 = vsub.f32 %v308, %v514
    %v564 = vsub.f32 %v309, %v515
    %v565 = vsub.f32 %v310, %v515
    %v566 = vsub.f32 %v311, %v515
    %v567 = vsub.f32 %v312, %v515
    %v568 = vsub.f32 %v313, %v516
    %v569 = vsub.f32 %v314, %v516
    %v570 = vsub.f32 %v315, %v516
    %v571 = vsub.f32 %v316, %v516
    %v572 = vsub.f32 %v317, %v517
    %v573 = vsub.f32 %v318, %v517
    %v574 = vsub.f32 %v319, %v517
    %v575 = vsub.f32 %v320, %v517
    %v576 = vsub.f32 %v321, %v518
    %v577 = vsub.f32 %v322, %v518
    %v578 = vsub.f32 %v323, %v518
    %v579 = vsub.f32 %v324, %v518
    %v580 = vsub.f32 %v325, %v519
    %v581 = vsub.f32 %v326, %v519
    %v582 = vsub.f32 %v327, %v519
    %v583 = vsub.f32 %v328, %v519
    %v584 = vsub.f32 %v329, %v520
    %v585 = vsub.f32 %v330, %v520
    %v586 = vsub.f32 %v331, %v520
    %v587 = vsub.f32 %v332, %v520
    %v588 = vsub.f32 %v333, %v521
    %v589 = vsub.f32 %v334, %v521
    %v590 = vsub.f32 %v335, %v521
    %v591 = vsub.f32 %v336, %v521
    %v592 = vsub.f32 %v337, %v522
    %v593 = vsub.f32 %v338, %v522
    %v594 = vsub.f32 %v339, %v522
    %v595 = vsub.f32 %v340, %v522
    %v596 = vsub.f32 %v341, %v523
    %v597 = vsub.f32 %v342, %v523
    %v598 = vsub.f32 %v343, %v523
    %v599 = vsub.f32 %v344, %v523
    %v600 = vsub.f32 %v345, %v524
    %v601 = vsub.f32 %v346, %v524
    %v602 = vsub.f32 %v347, %v524
    %v603 = vsub.f32 %v348, %v524
    %v604 = vsub.f32 %v349, %v525
    %v605 = vsub.f32 %v350, %v525
    %v606 = vsub.f32 %v351, %v525
    %v607 = vsub.f32 %v352, %v525
    %v608 = vsub.f32 %v353, %v526
    %v609 = vsub.f32 %v354, %v526
    %v610 = vsub.f32 %v355, %v526
    %v611 = vsub.f32 %v356, %v526
    %v612 = vsub.f32 %v357, %v527
    %v613 = vsub.f32 %v358, %v527
    %v614 = vsub.f32 %v359, %v527
    %v615 = vsub.f32 %v360, %v527
    %v616 = vsub.f32 %v361, %v528
    %v617 = vsub.f32 %v362, %v528
    %v618 = vsub.f32 %v363, %v528
    %v619 = vsub.f32 %v364, %v528
    %v620 = vsub.f32 %v365, %v529
    %v621 = vsub.f32 %v366, %v529
    %v622 = vsub.f32 %v367, %v529
    %v623 = vsub.f32 %v368, %v529
    %v624 = vsub.f32 %v369, %v530
    %v625 = vsub.f32 %v370, %v530
    %v626 = vsub.f32 %v371, %v530
    %v627 = vsub.f32 %v372, %v530
    %v628 = vsub.f32 %v373, %v531
    %v629 = vsub.f32 %v374, %v531
    %v630 = vsub.f32 %v375, %v531
    %v631 = vsub.f32 %v376, %v531
    %v632 = vmul.f32 %v532, %v532
    %v633 = vmul.f32 %v533, %v533
    %v634 = vmul.f32 %v534, %v534
    %v635 = vmul.f32 %v535, %v535
    %v636 = vmul.f32 %v536, %v536
    %v637 = vmul.f32 %v537, %v537
    %v638 = vmul.f32 %v538, %v538
    %v639 = vmul.f32 %v539, %v539
    %v640 = vmul.f32 %v540, %v540
    %v641 = vmul.f32 %v541, %v541
    %v642 = vmul.f32 %v542, %v542
    %v643 = vmul.f32 %v543, %v543
    %v644 = vmul.f32 %v544, %v544
    %v645 = vmul.f32 %v545, %v545
    %v646 = vmul.f32 %v546, %v546
    %v647 = vmul.f32 %v547, %v547
    %v648 = vmul.f32 %v548, %v548
    %v649 = vmul.f32 %v549, %v549
    %v650 = vmul.f32 %v550, %v550
    %v651 = vmul.f32 %v551, %v551
    %v652 = vmul.f32 %v552, %v552
    %v653 = vmul.f32 %v553, %v553
    %v654 = vmul.f32 %v554, %v554
    %v655 = vmul.f32 %v555, %v555
    %v656 = vmul.f32 %v556, %v556
    %v657 = vmul.f32 %v557, %v557
    %v658 = vmul.f32 %v558, %v558
    %v659 = vmul.f32 %v559, %v559
    %v660 = vmul.f32 %v560, %v560
    %v661 = vmul.f32 %v561, %v561
    %v662 = vmul.f32 %v562, %v562
    %v663 = vmul.f32 %v563, %v563
    %v664 = vmul.f32 %v564, %v564
    %v665 = vmul.f32 %v565, %v565
    %v666 = vmul.f32 %v566, %v566
    %v667 = vmul.f32 %v567, %v567
    %v668 = vmul.f32 %v568, %v568
    %v669 = vmul.f32 %v569, %v569
    %v670 = vmul.f32 %v570, %v570
    %v671 = vmul.f32 %v571, %v571
    %v672 = vmul.f32 %v572, %v572
    %v673 = vmul.f32 %v573, %v573
    %v674 = vmul.f32 %v574, %v574
    %v675 = vmul.f32 %v575, %v575
    %v676 = vmul.f32 %v576, %v576
    %v677 = vmul.f32 %v577, %v577
    %v678 = vmul.f32 %v578, %v578
    %v679 = vmul.f32 %v579, %v579
    %v680 = vmul.f32 %v580, %v580
    %v681 = vmul.f32 %v581, %v581
    %v682 = vmul.f32 %v582, %v582
    %v683 = vmul.f32 %v583, %v583
    %v684 = vmul.f32 %v584, %v584
    %v685 = vmul.f32 %v585, %v585
    %v686 = vmul.f32 %v586, %v586
    %v687 = vmul.f32 %v587, %v587
    %v688 = vmul.f32 %v588, %v588
    %v689 = vmul.f32 %v589, %v589
    %v690 = vmul.f32 %v590, %v590
    %v691 = vmul.f32 %v591, %v591
    %v692 = vmul.f32 %v592, %v592
    %v693 = vmul.f32 %v593, %v593
    %v694 = vmul.f32 %v594, %v594
    %v695 = vmul.f32 %v595, %v595
    %v696 = vmul.f32 %v596, %v596
    %v697 = vmul.f32 %v597, %v597
    %v698 = vmul.f32 %v598, %v598
    %v699 = vmul.f32 %v599, %v599
    %v700 = vmul.f32 %v600, %v600
    %v701 = vmul.f32 %v601, %v601
    %v702 = vmul.f32 %v602, %v602
    %v703 = vmul.f32 %v603, %v603
    %v704 = vmul.f32 %v604, %v604
    %v705 = vmul.f32 %v605, %v605
    %v706 = vmul.f32 %v606, %v606
    %v707 = vmul.f32 %v607, %v607
    %v708 = vmul.f32 %v608, %v608
    %v709 = vmul.f32 %v609, %v609
    %v710 = vmul.f32 %v610, %v610
    %v711 = vmul.f32 %v611, %v611
    %v712 = vmul.f32 %v612, %v612
    %v713 = vmul.f32 %v613, %v613
    %v714 = vmul.f32 %v614, %v614
    %v715 = vmul.f32 %v615, %v615
    %v716 = vmul.f32 %v616, %v616
    %v717 = vmul.f32 %v617, %v617
    %v718 = vmul.f32 %v618, %v618
    %v719 = vmul.f32 %v619, %v619
    %v720 = vmul.f32 %v620, %v620
    %v721 = vmul.f32 %v621, %v621
    %v722 = vmul.f32 %v622, %v622
    %v723 = vmul.f32 %v623, %v623
    %v724 = vmul.f32 %v624, %v624
    %v725 = vmul.f32 %v625, %v625
    %v726 = vmul.f32 %v626, %v626
    %v727 = vmul.f32 %v627, %v627
    %v728 = vmul.f32 %v628, %v628
    %v729 = vmul.f32 %v629, %v629
    %v730 = vmul.f32 %v630, %v630
    %v731 = vmul.f32 %v631, %v631
    %v732 = vadd.f32 %v632, %v633
    %v733 = vadd.f32 %v732, %v634
    %v734 = vadd.f32 %v733, %v635
    %735 = vadd.xlane.f32.xlu0 %v734
    %v736 = vpop.xlane.xlu0 %735
    %v737 = vadd.f32 %v636, %v637
    %v738 = vadd.f32 %v737, %v638
    %v739 = vadd.f32 %v738, %v639
    %740 = vadd.xlane.f32.xlu0 %v739
    %v741 = vpop.xlane.xlu0 %740
    %v742 = vadd.f32 %v640, %v641
    %v743 = vadd.f32 %v742, %v642
    %v744 = vadd.f32 %v743, %v643
    %745 = vadd.xlane.f32.xlu0 %v744
    %v746 = vpop.xlane.xlu0 %745
    %v747 = vadd.f32 %v644, %v645
    %v748 = vadd.f32 %v747, %v646
    %v749 = vadd.f32 %v748, %v647
    %750 = vadd.xlane.f32.xlu0 %v749
    %v751 = vpop.xlane.xlu0 %750
    %v752 = vadd.f32 %v648, %v649
    %v753 = vadd.f32 %v752, %v650
    %v754 = vadd.f32 %v753, %v651
    %755 = vadd.xlane.f32.xlu0 %v754
    %v756 = vpop.xlane.xlu0 %755
    %v757 = vadd.f32 %v652, %v653
    %v758 = vadd.f32 %v757, %v654
    %v759 = vadd.f32 %v758, %v655
    %760 = vadd.xlane.f32.xlu0 %v759
    %v761 = vpop.xlane.xlu0 %760
    %v762 = vadd.f32 %v656, %v657
    %v763 = vadd.f32 %v762, %v658
    %v764 = vadd.f32 %v763, %v659
    %765 = vadd.xlane.f32.xlu0 %v764
    %v766 = vpop.xlane.xlu0 %765
    %v767 = vadd.f32 %v660, %v661
    %v768 = vadd.f32 %v767, %v662
    %v769 = vadd.f32 %v768, %v663
    %770 = vadd.xlane.f32.xlu0 %v769
    %v771 = vpop.xlane.xlu0 %770
    %v772 = vadd.f32 %v664, %v665
    %v773 = vadd.f32 %v772, %v666
    %v774 = vadd.f32 %v773, %v667
    %775 = vadd.xlane.f32.xlu0 %v774
    %v776 = vpop.xlane.xlu0 %775
    %v777 = vadd.f32 %v668, %v669
    %v778 = vadd.f32 %v777, %v670
    %v779 = vadd.f32 %v778, %v671
    %780 = vadd.xlane.f32.xlu0 %v779
    %v781 = vpop.xlane.xlu0 %780
    %v782 = vadd.f32 %v672, %v673
    %v783 = vadd.f32 %v782, %v674
    %v784 = vadd.f32 %v783, %v675
    %785 = vadd.xlane.f32.xlu0 %v784
    %v786 = vpop.xlane.xlu0 %785
    %v787 = vadd.f32 %v676, %v677
    %v788 = vadd.f32 %v787, %v678
    %v789 = vadd.f32 %v788, %v679
    %790 = vadd.xlane.f32.xlu0 %v789
    %v791 = vpop.xlane.xlu0 %790
    %v792 = vadd.f32 %v680, %v681
    %v793 = vadd.f32 %v792, %v682
    %v794 = vadd.f32 %v793, %v683
    %795 = vadd.xlane.f32.xlu0 %v794
    %v796 = vpop.xlane.xlu0 %795
    %v797 = vadd.f32 %v684, %v685
    %v798 = vadd.f32 %v797, %v686
    %v799 = vadd.f32 %v798, %v687
    %800 = vadd.xlane.f32.xlu0 %v799
    %v801 = vpop.xlane.xlu0 %800
    %v802 = vadd.f32 %v688, %v689
    %v803 = vadd.f32 %v802, %v690
    %v804 = vadd.f32 %v803, %v691
    %805 = vadd.xlane.f32.xlu0 %v804
    %v806 = vpop.xlane.xlu0 %805
    %v807 = vadd.f32 %v692, %v693
    %v808 = vadd.f32 %v807, %v694
    %v809 = vadd.f32 %v808, %v695
    %810 = vadd.xlane.f32.xlu0 %v809
    %v811 = vpop.xlane.xlu0 %810
    %v812 = vadd.f32 %v696, %v697
    %v813 = vadd.f32 %v812, %v698
    %v814 = vadd.f32 %v813, %v699
    %815 = vadd.xlane.f32.xlu0 %v814
    %v816 = vpop.xlane.xlu0 %815
    %v817 = vadd.f32 %v700, %v701
    %v818 = vadd.f32 %v817, %v702
    %v819 = vadd.f32 %v818, %v703
    %820 = vadd.xlane.f32.xlu0 %v819
    %v821 = vpop.xlane.xlu0 %820
    %v822 = vadd.f32 %v704, %v705
    %v823 = vadd.f32 %v822, %v706
    %v824 = vadd.f32 %v823, %v707
    %825 = vadd.xlane.f32.xlu0 %v824
    %v826 = vpop.xlane.xlu0 %825
    %v827 = vadd.f32 %v708, %v709
    %v828 = vadd.f32 %v827, %v710
    %v829 = vadd.f32 %v828, %v711
    %830 = vadd.xlane.f32.xlu0 %v829
    %v831 = vpop.xlane.xlu0 %830
    %v832 = vadd.f32 %v712, %v713
    %v833 = vadd.f32 %v832, %v714
    %v834 = vadd.f32 %v833, %v715
    %835 = vadd.xlane.f32.xlu0 %v834
    %v836 = vpop.xlane.xlu0 %835
    %v837 = vadd.f32 %v716, %v717
    %v838 = vadd.f32 %v837, %v718
    %v839 = vadd.f32 %v838, %v719
    %840 = vadd.xlane.f32.xlu0 %v839
    %v841 = vpop.xlane.xlu0 %840
    %v842 = vadd.f32 %v720, %v721
    %v843 = vadd.f32 %v842, %v722
    %v844 = vadd.f32 %v843, %v723
    %845 = vadd.xlane.f32.xlu0 %v844
    %v846 = vpop.xlane.xlu0 %845
    %v847 = vadd.f32 %v724, %v725
    %v848 = vadd.f32 %v847, %v726
    %v849 = vadd.f32 %v848, %v727
    %850 = vadd.xlane.f32.xlu0 %v849
    %v851 = vpop.xlane.xlu0 %850
    %v852 = vsel %vm497, %v728, 0.0
    %v853 = vsel %vm497, %v729, 0.0
    %v854 = vadd.f32 %v852, %v853
    %v855 = vsel %vm497, %v730, 0.0
    %v856 = vadd.f32 %v854, %v855
    %v857 = vsel %vm497, %v731, 0.0
    %v858 = vadd.f32 %v856, %v857
    %859 = vadd.xlane.f32.xlu0 %v858
    %v860 = vpop.xlane.xlu0 %859
    %v861 = vmul.f32 %v736, 0.001953125
    %v862 = vmul.f32 %v741, 0.001953125
    %v863 = vmul.f32 %v746, 0.001953125
    %v864 = vmul.f32 %v751, 0.001953125
    %v865 = vmul.f32 %v756, 0.001953125
    %v866 = vmul.f32 %v761, 0.001953125
    %v867 = vmul.f32 %v766, 0.001953125
    %v868 = vmul.f32 %v771, 0.001953125
    %v869 = vmul.f32 %v776, 0.001953125
    %v870 = vmul.f32 %v781, 0.001953125
    %v871 = vmul.f32 %v786, 0.001953125
    %v872 = vmul.f32 %v791, 0.001953125
    %v873 = vmul.f32 %v796, 0.001953125
    %v874 = vmul.f32 %v801, 0.001953125
    %v875 = vmul.f32 %v806, 0.001953125
    %v876 = vmul.f32 %v811, 0.001953125
    %v877 = vmul.f32 %v816, 0.001953125
    %v878 = vmul.f32 %v821, 0.001953125
    %v879 = vmul.f32 %v826, 0.001953125
    %v880 = vmul.f32 %v831, 0.001953125
    %v881 = vmul.f32 %v836, 0.001953125
    %v882 = vmul.f32 %v841, 0.001953125
    %v883 = vmul.f32 %v846, 0.001953125
    %v884 = vmul.f32 %v851, 0.001953125
    %v885 = vmul.f32 %v860, 0.001953125
    %v886 = vadd.f32 %v861, 1e-05
    %v887 = vadd.f32 %v862, 1e-05
    %v888 = vadd.f32 %v863, 1e-05
    %v889 = vadd.f32 %v864, 1e-05
    %v890 = vadd.f32 %v865, 1e-05
    %v891 = vadd.f32 %v866, 1e-05
    %v892 = vadd.f32 %v867, 1e-05
    %v893 = vadd.f32 %v868, 1e-05
    %v894 = vadd.f32 %v869, 1e-05
    %v895 = vadd.f32 %v870, 1e-05
    %v896 = vadd.f32 %v871, 1e-05
    %v897 = vadd.f32 %v872, 1e-05
    %v898 = vadd.f32 %v873, 1e-05
    %v899 = vadd.f32 %v874, 1e-05
    %v900 = vadd.f32 %v875, 1e-05
    %v901 = vadd.f32 %v876, 1e-05
    %v902 = vadd.f32 %v877, 1e-05
    %v903 = vadd.f32 %v878, 1e-05
    %v904 = vadd.f32 %v879, 1e-05
    %v905 = vadd.f32 %v880, 1e-05
    %v906 = vadd.f32 %v881, 1e-05
    %v907 = vadd.f32 %v882, 1e-05
    %v908 = vadd.f32 %v883, 1e-05
    %v909 = vadd.f32 %v884, 1e-05
    %v910 = vadd.f32 %v885, 1e-05
    %v911 = vrsqrt.pop %v886
    %v912 = vmul.f32 %v911, %v886
    %v913 = vmul.f32 %v912, %v911
    %v914 = vmul.f32 0.5, %v913
    %v915 = vsub.f32 1.5, %v914
    %v916 = vmul.f32 %v911, %v915
    %vm917 = vweird.f32 %v886
    %vm918 = vweird.f32 %v911
    %vm919 = vmor %vm917, %vm918
    %v920 = vsel %vm919, %v911, %v916
    %v921 = vrsqrt.pop %v887
    %v922 = vmul.f32 %v921, %v887
    %v923 = vmul.f32 %v922, %v921
    %v924 = vmul.f32 0.5, %v923
    %v925 = vsub.f32 1.5, %v924
    %v926 = vmul.f32 %v921, %v925
    %vm927 = vweird.f32 %v887
    %vm928 = vweird.f32 %v921
    %vm929 = vmor %vm927, %vm928
    %v930 = vsel %vm929, %v921, %v926
    %v931 = vrsqrt.pop %v888
    %v932 = vmul.f32 %v931, %v888
    %v933 = vmul.f32 %v932, %v931
    %v934 = vmul.f32 0.5, %v933
    %v935 = vsub.f32 1.5, %v934
    %v936 = vmul.f32 %v931, %v935
    %vm937 = vweird.f32 %v888
    %vm938 = vweird.f32 %v931
    %vm939 = vmor %vm937, %vm938
    %v940 = vsel %vm939, %v931, %v936
    %v941 = vrsqrt.pop %v889
    %v942 = vmul.f32 %v941, %v889
    %v943 = vmul.f32 %v942, %v941
    %v944 = vmul.f32 0.5, %v943
    %v945 = vsub.f32 1.5, %v944
    %v946 = vmul.f32 %v941, %v945
    %vm947 = vweird.f32 %v889
    %vm948 = vweird.f32 %v941
    %vm949 = vmor %vm947, %vm948
    %v950 = vsel %vm949, %v941, %v946
    %v951 = vrsqrt.pop %v890
    %v952 = vmul.f32 %v951, %v890
    %v953 = vmul.f32 %v952, %v951
    %v954 = vmul.f32 0.5, %v953
    %v955 = vsub.f32 1.5, %v954
    %v956 = vmul.f32 %v951, %v955
    %vm957 = vweird.f32 %v890
    %vm958 = vweird.f32 %v951
    %vm959 = vmor %vm957, %vm958
    %v960 = vsel %vm959, %v951, %v956
    %v961 = vrsqrt.pop %v891
    %v962 = vmul.f32 %v961, %v891
    %v963 = vmul.f32 %v962, %v961
    %v964 = vmul.f32 0.5, %v963
    %v965 = vsub.f32 1.5, %v964
    %v966 = vmul.f32 %v961, %v965
    %vm967 = vweird.f32 %v891
    %vm968 = vweird.f32 %v961
    %vm969 = vmor %vm967, %vm968
    %v970 = vsel %vm969, %v961, %v966
    %v971 = vrsqrt.pop %v892
    %v972 = vmul.f32 %v971, %v892
    %v973 = vmul.f32 %v972, %v971
    %v974 = vmul.f32 0.5, %v973
    %v975 = vsub.f32 1.5, %v974
    %v976 = vmul.f32 %v971, %v975
    %vm977 = vweird.f32 %v892
    %vm978 = vweird.f32 %v971
    %vm979 = vmor %vm977, %vm978
    %v980 = vsel %vm979, %v971, %v976
    %v981 = vrsqrt.pop %v893
    %v982 = vmul.f32 %v981, %v893
    %v983 = vmul.f32 %v982, %v981
    %v984 = vmul.f32 0.5, %v983
    %v985 = vsub.f32 1.5, %v984
    %v986 = vmul.f32 %v981, %v985
    %vm987 = vweird.f32 %v893
    %vm988 = vweird.f32 %v981
    %vm989 = vmor %vm987, %vm988
    %v990 = vsel %vm989, %v981, %v986
    %v991 = vrsqrt.pop %v894
    %v992 = vmul.f32 %v991, %v894
    %v993 = vmul.f32 %v992, %v991
    %v994 = vmul.f32 0.5, %v993
    %v995 = vsub.f32 1.5, %v994
    %v996 = vmul.f32 %v991, %v995
    %vm997 = vweird.f32 %v894
    %vm998 = vweird.f32 %v991
    %vm999 = vmor %vm997, %vm998
    %v1000 = vsel %vm999, %v991, %v996
    %v1001 = vrsqrt.pop %v895
    %v1002 = vmul.f32 %v1001, %v895
    %v1003 = vmul.f32 %v1002, %v1001
    %v1004 = vmul.f32 0.5, %v1003
    %v1005 = vsub.f32 1.5, %v1004
    %v1006 = vmul.f32 %v1001, %v1005
    %vm1007 = vweird.f32 %v895
    %vm1008 = vweird.f32 %v1001
    %vm1009 = vmor %vm1007, %vm1008
    %v1010 = vsel %vm1009, %v1001, %v1006
    %v1011 = vrsqrt.pop %v896
    %v1012 = vmul.f32 %v1011, %v896
    %v1013 = vmul.f32 %v1012, %v1011
    %v1014 = vmul.f32 0.5, %v1013
    %v1015 = vsub.f32 1.5, %v1014
    %v1016 = vmul.f32 %v1011, %v1015
    %vm1017 = vweird.f32 %v896
    %vm1018 = vweird.f32 %v1011
    %vm1019 = vmor %vm1017, %vm1018
    %v1020 = vsel %vm1019, %v1011, %v1016
    %v1021 = vrsqrt.pop %v897
    %v1022 = vmul.f32 %v1021, %v897
    %v1023 = vmul.f32 %v1022, %v1021
    %v1024 = vmul.f32 0.5, %v1023
    %v1025 = vsub.f32 1.5, %v1024
    %v1026 = vmul.f32 %v1021, %v1025
    %vm1027 = vweird.f32 %v897
    %vm1028 = vweird.f32 %v1021
    %vm1029 = vmor %vm1027, %vm1028
    %v1030 = vsel %vm1029, %v1021, %v1026
    %v1031 = vrsqrt.pop %v898
    %v1032 = vmul.f32 %v1031, %v898
    %v1033 = vmul.f32 %v1032, %v1031
    %v1034 = vmul.f32 0.5, %v1033
    %v1035 = vsub.f32 1.5, %v1034
    %v1036 = vmul.f32 %v1031, %v1035
    %vm1037 = vweird.f32 %v898
    %vm1038 = vweird.f32 %v1031
    %vm1039 = vmor %vm1037, %vm1038
    %v1040 = vsel %vm1039, %v1031, %v1036
    %v1041 = vrsqrt.pop %v899
    %v1042 = vmul.f32 %v1041, %v899
    %v1043 = vmul.f32 %v1042, %v1041
    %v1044 = vmul.f32 0.5, %v1043
    %v1045 = vsub.f32 1.5, %v1044
    %v1046 = vmul.f32 %v1041, %v1045
    %vm1047 = vweird.f32 %v899
    %vm1048 = vweird.f32 %v1041
    %vm1049 = vmor %vm1047, %vm1048
    %v1050 = vsel %vm1049, %v1041, %v1046
    %v1051 = vrsqrt.pop %v900
    %v1052 = vmul.f32 %v1051, %v900
    %v1053 = vmul.f32 %v1052, %v1051
    %v1054 = vmul.f32 0.5, %v1053
    %v1055 = vsub.f32 1.5, %v1054
    %v1056 = vmul.f32 %v1051, %v1055
    %vm1057 = vweird.f32 %v900
    %vm1058 = vweird.f32 %v1051
    %vm1059 = vmor %vm1057, %vm1058
    %v1060 = vsel %vm1059, %v1051, %v1056
    %v1061 = vrsqrt.pop %v901
    %v1062 = vmul.f32 %v1061, %v901
    %v1063 = vmul.f32 %v1062, %v1061
    %v1064 = vmul.f32 0.5, %v1063
    %v1065 = vsub.f32 1.5, %v1064
    %v1066 = vmul.f32 %v1061, %v1065
    %vm1067 = vweird.f32 %v901
    %vm1068 = vweird.f32 %v1061
    %vm1069 = vmor %vm1067, %vm1068
    %v1070 = vsel %vm1069, %v1061, %v1066
    %v1071 = vrsqrt.pop %v902
    %v1072 = vmul.f32 %v1071, %v902
    %v1073 = vmul.f32 %v1072, %v1071
    %v1074 = vmul.f32 0.5, %v1073
    %v1075 = vsub.f32 1.5, %v1074
    %v1076 = vmul.f32 %v1071, %v1075
    %vm1077 = vweird.f32 %v902
    %vm1078 = vweird.f32 %v1071
    %vm1079 = vmor %vm1077, %vm1078
    %v1080 = vsel %vm1079, %v1071, %v1076
    %v1081 = vrsqrt.pop %v903
    %v1082 = vmul.f32 %v1081, %v903
    %v1083 = vmul.f32 %v1082, %v1081
    %v1084 = vmul.f32 0.5, %v1083
    %v1085 = vsub.f32 1.5, %v1084
    %v1086 = vmul.f32 %v1081, %v1085
    %vm1087 = vweird.f32 %v903
    %vm1088 = vweird.f32 %v1081
    %vm1089 = vmor %vm1087, %vm1088
    %v1090 = vsel %vm1089, %v1081, %v1086
    %v1091 = vrsqrt.pop %v904
    %v1092 = vmul.f32 %v1091, %v904
    %v1093 = vmul.f32 %v1092, %v1091
    %v1094 = vmul.f32 0.5, %v1093
    %v1095 = vsub.f32 1.5, %v1094
    %v1096 = vmul.f32 %v1091, %v1095
    %vm1097 = vweird.f32 %v904
    %vm1098 = vweird.f32 %v1091
    %vm1099 = vmor %vm1097, %vm1098
    %v1100 = vsel %vm1099, %v1091, %v1096
    %v1101 = vrsqrt.pop %v905
    %v1102 = vmul.f32 %v1101, %v905
    %v1103 = vmul.f32 %v1102, %v1101
    %v1104 = vmul.f32 0.5, %v1103
    %v1105 = vsub.f32 1.5, %v1104
    %v1106 = vmul.f32 %v1101, %v1105
    %vm1107 = vweird.f32 %v905
    %vm1108 = vweird.f32 %v1101
    %vm1109 = vmor %vm1107, %vm1108
    %v1110 = vsel %vm1109, %v1101, %v1106
    %v1111 = vrsqrt.pop %v906
    %v1112 = vmul.f32 %v1111, %v906
    %v1113 = vmul.f32 %v1112, %v1111
    %v1114 = vmul.f32 0.5, %v1113
    %v1115 = vsub.f32 1.5, %v1114
    %v1116 = vmul.f32 %v1111, %v1115
    %vm1117 = vweird.f32 %v906
    %vm1118 = vweird.f32 %v1111
    %vm1119 = vmor %vm1117, %vm1118
    %v1120 = vsel %vm1119, %v1111, %v1116
    %v1121 = vrsqrt.pop %v907
    %v1122 = vmul.f32 %v1121, %v907
    %v1123 = vmul.f32 %v1122, %v1121
    %v1124 = vmul.f32 0.5, %v1123
    %v1125 = vsub.f32 1.5, %v1124
    %v1126 = vmul.f32 %v1121, %v1125
    %vm1127 = vweird.f32 %v907
    %vm1128 = vweird.f32 %v1121
    %vm1129 = vmor %vm1127, %vm1128
    %v1130 = vsel %vm1129, %v1121, %v1126
    %v1131 = vrsqrt.pop %v908
    %v1132 = vmul.f32 %v1131, %v908
    %v1133 = vmul.f32 %v1132, %v1131
    %v1134 = vmul.f32 0.5, %v1133
    %v1135 = vsub.f32 1.5, %v1134
    %v1136 = vmul.f32 %v1131, %v1135
    %vm1137 = vweird.f32 %v908
    %vm1138 = vweird.f32 %v1131
    %vm1139 = vmor %vm1137, %vm1138
    %v1140 = vsel %vm1139, %v1131, %v1136
    %v1141 = vrsqrt.pop %v909
    %v1142 = vmul.f32 %v1141, %v909
    %v1143 = vmul.f32 %v1142, %v1141
    %v1144 = vmul.f32 0.5, %v1143
    %v1145 = vsub.f32 1.5, %v1144
    %v1146 = vmul.f32 %v1141, %v1145
    %vm1147 = vweird.f32 %v909
    %vm1148 = vweird.f32 %v1141
    %vm1149 = vmor %vm1147, %vm1148
    %v1150 = vsel %vm1149, %v1141, %v1146
    %v1151 = vrsqrt.pop %v910
    %v1152 = vmul.f32 %v1151, %v910
    %v1153 = vmul.f32 %v1152, %v1151
    %v1154 = vmul.f32 0.5, %v1153
    %v1155 = vsub.f32 1.5, %v1154
    %v1156 = vmul.f32 %v1151, %v1155
    %vm1157 = vweird.f32 %v910
    %vm1158 = vweird.f32 %v1151
    %vm1159 = vmor %vm1157, %vm1158
    %v1160 = vsel %vm1159, %v1151, %v1156
    %v1161 = vld [vmem:[#allocation7] sm:$0xf]
    %v1162 = vld [vmem:[#allocation8] sm:$0xf]
    %v1163 = vmul.f32 %v532, %v920
    %v1164 = vmul.f32 %v533, %v920
    %v1165 = vmul.f32 %v534, %v920
    %v1166 = vmul.f32 %v535, %v920
    %v1167 = vmul.f32 %v536, %v930
    %v1168 = vmul.f32 %v537, %v930
    %v1169 = vmul.f32 %v538, %v930
    %v1170 = vmul.f32 %v539, %v930
    %v1171 = vmul.f32 %v540, %v940
    %v1172 = vmul.f32 %v541, %v940
    %v1173 = vmul.f32 %v542, %v940
    %v1174 = vmul.f32 %v543, %v940
    %v1175 = vmul.f32 %v544, %v950
    %v1176 = vmul.f32 %v545, %v950
    %v1177 = vmul.f32 %v546, %v950
    %v1178 = vmul.f32 %v547, %v950
    %v1179 = vmul.f32 %v548, %v960
    %v1180 = vmul.f32 %v549, %v960
    %v1181 = vmul.f32 %v550, %v960
    %v1182 = vmul.f32 %v551, %v960
    %v1183 = vmul.f32 %v552, %v970
    %v1184 = vmul.f32 %v553, %v970
    %v1185 = vmul.f32 %v554, %v970
    %v1186 = vmul.f32 %v555, %v970
    %v1187 = vmul.f32 %v556, %v980
    %v1188 = vmul.f32 %v557, %v980
    %v1189 = vmul.f32 %v558, %v980
    %v1190 = vmul.f32 %v559, %v980
    %v1191 = vmul.f32 %v560, %v990
    %v1192 = vmul.f32 %v561, %v990
    %v1193 = vmul.f32 %v562, %v990
    %v1194 = vmul.f32 %v563, %v990
    %v1195 = vmul.f32 %v564, %v1000
    %v1196 = vmul.f32 %v565, %v1000
    %v1197 = vmul.f32 %v566, %v1000
    %v1198 = vmul.f32 %v567, %v1000
    %v1199 = vmul.f32 %v568, %v1010
    %v1200 = vmul.f32 %v569, %v1010
    %v1201 = vmul.f32 %v570, %v1010
    %v1202 = vmul.f32 %v571, %v1010
    %v1203 = vmul.f32 %v572, %v1020
    %v1204 = vmul.f32 %v573, %v1020
    %v1205 = vmul.f32 %v574, %v1020
    %v1206 = vmul.f32 %v575, %v1020
    %v1207 = vmul.f32 %v576, %v1030
    %v1208 = vmul.f32 %v577, %v1030
    %v1209 = vmul.f32 %v578, %v1030
    %v1210 = vmul.f32 %v579, %v1030
    %v1211 = vmul.f32 %v580, %v1040
    %v1212 = vmul.f32 %v581, %v1040
    %v1213 = vmul.f32 %v582, %v1040
    %v1214 = vmul.f32 %v583, %v1040
    %v1215 = vmul.f32 %v584, %v1050
    %v1216 = vmul.f32 %v585, %v1050
    %v1217 = vmul.f32 %v586, %v1050
    %v1218 = vmul.f32 %v587, %v1050
    %v1219 = vmul.f32 %v588, %v1060
    %v1220 = vmul.f32 %v589, %v1060
    %v1221 = vmul.f32 %v590, %v1060
    %v1222 = vmul.f32 %v591, %v1060
    %v1223 = vmul.f32 %v592, %v1070
    %v1224 = vmul.f32 %v593, %v1070
    %v1225 = vmul.f32 %v594, %v1070
    %v1226 = vmul.f32 %v595, %v1070
    %v1227 = vmul.f32 %v596, %v1080
    %v1228 = vmul.f32 %v597, %v1080
    %v1229 = vmul.f32 %v598, %v1080
    %v1230 = vmul.f32 %v599, %v1080
    %v1231 = vmul.f32 %v600, %v1090
    %v1232 = vmul.f32 %v601, %v1090
    %v1233 = vmul.f32 %v602, %v1090
    %v1234 = vmul.f32 %v603, %v1090
    %v1235 = vmul.f32 %v604, %v1100
    %v1236 = vmul.f32 %v605, %v1100
    %v1237 = vmul.f32 %v606, %v1100
    %v1238 = vmul.f32 %v607, %v1100
    %v1239 = vmul.f32 %v608, %v1110
    %v1240 = vmul.f32 %v609, %v1110
    %v1241 = vmul.f32 %v610, %v1110
    %v1242 = vmul.f32 %v611, %v1110
    %v1243 = vmul.f32 %v612, %v1120
    %v1244 = vmul.f32 %v613, %v1120
    %v1245 = vmul.f32 %v614, %v1120
    %v1246 = vmul.f32 %v615, %v1120
    %v1247 = vmul.f32 %v616, %v1130
    %v1248 = vmul.f32 %v617, %v1130
    %v1249 = vmul.f32 %v618, %v1130
    %v1250 = vmul.f32 %v619, %v1130
    %v1251 = vmul.f32 %v620, %v1140
    %v1252 = vmul.f32 %v621, %v1140
    %v1253 = vmul.f32 %v622, %v1140
    %v1254 = vmul.f32 %v623, %v1140
    %v1255 = vmul.f32 %v624, %v1150
    %v1256 = vmul.f32 %v625, %v1150
    %v1257 = vmul.f32 %v626, %v1150
    %v1258 = vmul.f32 %v627, %v1150
    %v1259 = vmul.f32 %v628, %v1160
    %v1260 = vmul.f32 %v629, %v1160
    %v1261 = vmul.f32 %v630, %v1160
    %v1262 = vmul.f32 %v631, %v1160
    %v1264 = vperm.slane %v1161, 0
    %v1265 = vperm.slane %v1161, 1
    %v1266 = vperm.slane %v1161, 2
    %v1267 = vperm.slane %v1161, 3
    %v1272 = vmul.f32 %v1163, %v1264
    %v1273 = vmul.f32 %v1164, %v1265
    %v1274 = vmul.f32 %v1165, %v1266
    %v1275 = vmul.f32 %v1166, %v1267
    %v1276 = vmul.f32 %v1167, %v1264
    %v1277 = vmul.f32 %v1168, %v1265
    %v1278 = vmul.f32 %v1169, %v1266
    %v1279 = vmul.f32 %v1170, %v1267
    %v1280 = vmul.f32 %v1171, %v1264
    %v1281 = vmul.f32 %v1172, %v1265
    %v1282 = vmul.f32 %v1173, %v1266
    %v1283 = vmul.f32 %v1174, %v1267
    %v1284 = vmul.f32 %v1175, %v1264
    %v1285 = vmul.f32 %v1176, %v1265
    %v1286 = vmul.f32 %v1177, %v1266
    %v1287 = vmul.f32 %v1178, %v1267
    %v1288 = vmul.f32 %v1179, %v1264
    %v1289 = vmul.f32 %v1180, %v1265
    %v1290 = vmul.f32 %v1181, %v1266
    %v1291 = vmul.f32 %v1182, %v1267
    %v1292 = vmul.f32 %v1183, %v1264
    %v1293 = vmul.f32 %v1184, %v1265
    %v1294 = vmul.f32 %v1185, %v1266
    %v1295 = vmul.f32 %v1186, %v1267
    %v1296 = vmul.f32 %v1187, %v1264
    %v1297 = vmul.f32 %v1188, %v1265
    %v1298 = vmul.f32 %v1189, %v1266
    %v1299 = vmul.f32 %v1190, %v1267
    %v1300 = vmul.f32 %v1191, %v1264
    %v1301 = vmul.f32 %v1192, %v1265
    %v1302 = vmul.f32 %v1193, %v1266
    %v1303 = vmul.f32 %v1194, %v1267
    %v1304 = vmul.f32 %v1195, %v1264
    %v1305 = vmul.f32 %v1196, %v1265
    %v1306 = vmul.f32 %v1197, %v1266
    %v1307 = vmul.f32 %v1198, %v1267
    %v1308 = vmul.f32 %v1199, %v1264
    %v1309 = vmul.f32 %v1200, %v1265
    %v1310 = vmul.f32 %v1201, %v1266
    %v1311 = vmul.f32 %v1202, %v1267
    %v1312 = vmul.f32 %v1203, %v1264
    %v1313 = vmul.f32 %v1204, %v1265
    %v1314 = vmul.f32 %v1205, %v1266
    %v1315 = vmul.f32 %v1206, %v1267
    %v1316 = vmul.f32 %v1207, %v1264
    %v1317 = vmul.f32 %v1208, %v1265
    %v1318 = vmul.f32 %v1209, %v1266
    %v1319 = vmul.f32 %v1210, %v1267
    %v1320 = vmul.f32 %v1211, %v1264
    %v1321 = vmul.f32 %v1212, %v1265
    %v1322 = vmul.f32 %v1213, %v1266
    %v1323 = vmul.f32 %v1214, %v1267
    %v1324 = vmul.f32 %v1215, %v1264
    %v1325 = vmul.f32 %v1216, %v1265
    %v1326 = vmul.f32 %v1217, %v1266
    %v1327 = vmul.f32 %v1218, %v1267
    %v1328 = vmul.f32 %v1219, %v1264
    %v1329 = vmul.f32 %v1220, %v1265
    %v1330 = vmul.f32 %v1221, %v1266
    %v1331 = vmul.f32 %v1222, %v1267
    %v1332 = vmul.f32 %v1223, %v1264
    %v1333 = vmul.f32 %v1224, %v1265
    %v1334 = vmul.f32 %v1225, %v1266
    %v1335 = vmul.f32 %v1226, %v1267
    %v1336 = vmul.f32 %v1227, %v1264
    %v1337 = vmul.f32 %v1228, %v1265
    %v1338 = vmul.f32 %v1229, %v1266
    %v1339 = vmul.f32 %v1230, %v1267
    %v1340 = vmul.f32 %v1231, %v1264
    %v1341 = vmul.f32 %v1232, %v1265
    %v1342 = vmul.f32 %v1233, %v1266
    %v1343 = vmul.f32 %v1234, %v1267
    %v1344 = vmul.f32 %v1235, %v1264
    %v1345 = vmul.f32 %v1236, %v1265
    %v1346 = vmul.f32 %v1237, %v1266
    %v1347 = vmul.f32 %v1238, %v1267
    %v1348 = vmul.f32 %v1239, %v1264
    %v1349 = vmul.f32 %v1240, %v1265
    %v1350 = vmul.f32 %v1241, %v1266
    %v1351 = vmul.f32 %v1242, %v1267
    %v1352 = vmul.f32 %v1243, %v1264
    %v1353 = vmul.f32 %v1244, %v1265
    %v1354 = vmul.f32 %v1245, %v1266
    %v1355 = vmul.f32 %v1246, %v1267
    %v1356 = vmul.f32 %v1247, %v1264
    %v1357 = vmul.f32 %v1248, %v1265
    %v1358 = vmul.f32 %v1249, %v1266
    %v1359 = vmul.f32 %v1250, %v1267
    %v1360 = vmul.f32 %v1251, %v1264
    %v1361 = vmul.f32 %v1252, %v1265
    %v1362 = vmul.f32 %v1253, %v1266
    %v1363 = vmul.f32 %v1254, %v1267
    %v1364 = vmul.f32 %v1255, %v1264
    %v1365 = vmul.f32 %v1256, %v1265
    %v1366 = vmul.f32 %v1257, %v1266
    %v1367 = vmul.f32 %v1258, %v1267
    %v1368 = vmul.f32 %v1259, %v1264
    %v1369 = vmul.f32 %v1260, %v1265
    %v1370 = vmul.f32 %v1261, %v1266
    %v1371 = vmul.f32 %v1262, %v1267
    %v1373 = vperm.slane %v1162, 0
    %v1374 = vperm.slane %v1162, 1
    %v1375 = vperm.slane %v1162, 2
    %v1376 = vperm.slane %v1162, 3
    %v1381 = vadd.f32 %v1272, %v1373
    %v1382 = vadd.f32 %v1273, %v1374
    %v1383 = vadd.f32 %v1274, %v1375
    %v1384 = vadd.f32 %v1275, %v1376
    %v1385 = vadd.f32 %v1276, %v1373
    %v1386 = vadd.f32 %v1277, %v1374
    %v1387 = vadd.f32 %v1278, %v1375
    %v1388 = vadd.f32 %v1279, %v1376
    %v1389 = vadd.f32 %v1280, %v1373
    %v1390 = vadd.f32 %v1281, %v1374
    %v1391 = vadd.f32 %v1282, %v1375
    %v1392 = vadd.f32 %v1283, %v1376
    %v1393 = vadd.f32 %v1284, %v1373
    %v1394 = vadd.f32 %v1285, %v1374
    %v1395 = vadd.f32 %v1286, %v1375
    %v1396 = vadd.f32 %v1287, %v1376
    %v1397 = vadd.f32 %v1288, %v1373
    %v1398 = vadd.f32 %v1289, %v1374
    %v1399 = vadd.f32 %v1290, %v1375
    %v1400 = vadd.f32 %v1291, %v1376
    %v1401 = vadd.f32 %v1292, %v1373
    %v1402 = vadd.f32 %v1293, %v1374
    %v1403 = vadd.f32 %v1294, %v1375
    %v1404 = vadd.f32 %v1295, %v1376
    %v1405 = vadd.f32 %v1296, %v1373
    %v1406 = vadd.f32 %v1297, %v1374
    %v1407 = vadd.f32 %v1298, %v1375
    %v1408 = vadd.f32 %v1299, %v1376
    %v1409 = vadd.f32 %v1300, %v1373
    %v1410 = vadd.f32 %v1301, %v1374
    %v1411 = vadd.f32 %v1302, %v1375
    %v1412 = vadd.f32 %v1303, %v1376
    %v1413 = vadd.f32 %v1304, %v1373
    %v1414 = vadd.f32 %v1305, %v1374
    %v1415 = vadd.f32 %v1306, %v1375
    %v1416 = vadd.f32 %v1307, %v1376
    %v1417 = vadd.f32 %v1308, %v1373
    %v1418 = vadd.f32 %v1309, %v1374
    %v1419 = vadd.f32 %v1310, %v1375
    %v1420 = vadd.f32 %v1311, %v1376
    %v1421 = vadd.f32 %v1312, %v1373
    %v1422 = vadd.f32 %v1313, %v1374
    %v1423 = vadd.f32 %v1314, %v1375
    %v1424 = vadd.f32 %v1315, %v1376
    %v1425 = vadd.f32 %v1316, %v1373
    %v1426 = vadd.f32 %v1317, %v1374
    %v1427 = vadd.f32 %v1318, %v1375
    %v1428 = vadd.f32 %v1319, %v1376
    %v1429 = vadd.f32 %v1320, %v1373
    %v1430 = vadd.f32 %v1321, %v1374
    %v1431 = vadd.f32 %v1322, %v1375
    %v1432 = vadd.f32 %v1323, %v1376
    %v1433 = vadd.f32 %v1324, %v1373
    %v1434 = vadd.f32 %v1325, %v1374
    %v1435 = vadd.f32 %v1326, %v1375
    %v1436 = vadd.f32 %v1327, %v1376
    %v1437 = vadd.f32 %v1328, %v1373
    %v1438 = vadd.f32 %v1329, %v1374
    %v1439 = vadd.f32 %v1330, %v1375
    %v1440 = vadd.f32 %v1331, %v1376
    %v1441 = vadd.f32 %v1332, %v1373
    %v1442 = vadd.f32 %v1333, %v1374
    %v1443 = vadd.f32 %v1334, %v1375
    %v1444 = vadd.f32 %v1335, %v1376
    %v1445 = vadd.f32 %v1336, %v1373
    %v1446 = vadd.f32 %v1337, %v1374
    %v1447 = vadd.f32 %v1338, %v1375
    %v1448 = vadd.f32 %v1339, %v1376
    %v1449 = vadd.f32 %v1340, %v1373
    %v1450 = vadd.f32 %v1341, %v1374
    %v1451 = vadd.f32 %v1342, %v1375
    %v1452 = vadd.f32 %v1343, %v1376
    %v1453 = vadd.f32 %v1344, %v1373
    %v1454 = vadd.f32 %v1345, %v1374
    %v1455 = vadd.f32 %v1346, %v1375
    %v1456 = vadd.f32 %v1347, %v1376
    %v1457 = vadd.f32 %v1348, %v1373
    %v1458 = vadd.f32 %v1349, %v1374
    %v1459 = vadd.f32 %v1350, %v1375
    %v1460 = vadd.f32 %v1351, %v1376
    %v1461 = vadd.f32 %v1352, %v1373
    %v1462 = vadd.f32 %v1353, %v1374
    %v1463 = vadd.f32 %v1354, %v1375
    %v1464 = vadd.f32 %v1355, %v1376
    %v1465 = vadd.f32 %v1356, %v1373
    %v1466 = vadd.f32 %v1357, %v1374
    %v1467 = vadd.f32 %v1358, %v1375
    %v1468 = vadd.f32 %v1359, %v1376
    %v1469 = vadd.f32 %v1360, %v1373
    %v1470 = vadd.f32 %v1361, %v1374
    %v1471 = vadd.f32 %v1362, %v1375
    %v1472 = vadd.f32 %v1363, %v1376
    %v1473 = vadd.f32 %v1364, %v1373
    %v1474 = vadd.f32 %v1365, %v1374
    %v1475 = vadd.f32 %v1366, %v1375
    %v1476 = vadd.f32 %v1367, %v1376
    %v1477 = vadd.f32 %v1368, %v1373
    %v1478 = vadd.f32 %v1369, %v1374
    %v1479 = vadd.f32 %v1370, %v1375
    %v1480 = vadd.f32 %v1371, %v1376
    %1481 = vst [vmem:[#allocation10] sm:$0xff] %v1381
    %1482 = vst [vmem:[#allocation10 + $0x8] sm:$0xff] %v1382
    %1483 = vst [vmem:[#allocation10 + $0x10] sm:$0xff] %v1383
    %1484 = vst [vmem:[#allocation10 + $0x18] sm:$0xff] %v1384
    %1485 = vst [vmem:[#allocation10 + $0x20] sm:$0xff] %v1385
    %1486 = vst [vmem:[#allocation10 + $0x28] sm:$0xff] %v1386
    %1487 = vst [vmem:[#allocation10 + $0x30] sm:$0xff] %v1387
    %1488 = vst [vmem:[#allocation10 + $0x38] sm:$0xff] %v1388
    %1489 = vst [vmem:[#allocation10 + $0x40] sm:$0xff] %v1389
    %1490 = vst [vmem:[#allocation10 + $0x48] sm:$0xff] %v1390
    %1491 = vst [vmem:[#allocation10 + $0x50] sm:$0xff] %v1391
    %1492 = vst [vmem:[#allocation10 + $0x58] sm:$0xff] %v1392
    %1493 = vst [vmem:[#allocation10 + $0x60] sm:$0xff] %v1393
    %1494 = vst [vmem:[#allocation10 + $0x68] sm:$0xff] %v1394
    %1495 = vst [vmem:[#allocation10 + $0x70] sm:$0xff] %v1395
    %1496 = vst [vmem:[#allocation10 + $0x78] sm:$0xff] %v1396
    %1497 = vst [vmem:[#allocation10 + $0x80] sm:$0xff] %v1397
    %1498 = vst [vmem:[#allocation10 + $0x88] sm:$0xff] %v1398
    %1499 = vst [vmem:[#allocation10 + $0x90] sm:$0xff] %v1399
    %1500 = vst [vmem:[#allocation10 + $0x98] sm:$0xff] %v1400
    %1501 = vst [vmem:[#allocation10 + $0xa0] sm:$0xff] %v1401
    %1502 = vst [vmem:[#allocation10 + $0xa8] sm:$0xff] %v1402
    %1503 = vst [vmem:[#allocation10 + $0xb0] sm:$0xff] %v1403
    %1504 = vst [vmem:[#allocation10 + $0xb8] sm:$0xff] %v1404
    %1505 = vst [vmem:[#allocation10 + $0xc0] sm:$0xff] %v1405
    %1506 = vst [vmem:[#allocation10 + $0xc8] sm:$0xff] %v1406
    %1507 = vst [vmem:[#allocation10 + $0xd0] sm:$0xff] %v1407
    %1508 = vst [vmem:[#allocation10 + $0xd8] sm:$0xff] %v1408
    %1509 = vst [vmem:[#allocation10 + $0xe0] sm:$0xff] %v1409
    %1510 = vst [vmem:[#allocation10 + $0xe8] sm:$0xff] %v1410
    %1511 = vst [vmem:[#allocation10 + $0xf0] sm:$0xff] %v1411
    %1512 = vst [vmem:[#allocation10 + $0xf8] sm:$0xff] %v1412
    %1513 = vst [vmem:[#allocation10 + $0x100] sm:$0xff] %v1413
    %1514 = vst [vmem:[#allocation10 + $0x108] sm:$0xff] %v1414
    %1515 = vst [vmem:[#allocation10 + $0x110] sm:$0xff] %v1415
    %1516 = vst [vmem:[#allocation10 + $0x118] sm:$0xff] %v1416
    %1517 = vst [vmem:[#allocation10 + $0x120] sm:$0xff] %v1417
    %1518 = vst [vmem:[#allocation10 + $0x128] sm:$0xff] %v1418
    %1519 = vst [vmem:[#allocation10 + $0x130] sm:$0xff] %v1419
    %1520 = vst [vmem:[#allocation10 + $0x138] sm:$0xff] %v1420
    %1521 = vst [vmem:[#allocation10 + $0x140] sm:$0xff] %v1421
    %1522 = vst [vmem:[#allocation10 + $0x148] sm:$0xff] %v1422
    %1523 = vst [vmem:[#allocation10 + $0x150] sm:$0xff] %v1423
    %1524 = vst [vmem:[#allocation10 + $0x158] sm:$0xff] %v1424
    %1525 = vst [vmem:[#allocation10 + $0x160] sm:$0xff] %v1425
    %1526 = vst [vmem:[#allocation10 + $0x168] sm:$0xff] %v1426
    %1527 = vst [vmem:[#allocation10 + $0x170] sm:$0xff] %v1427
    %1528 = vst [vmem:[#allocation10 + $0x178] sm:$0xff] %v1428
    %1529 = vst [vmem:[#allocation10 + $0x180] sm:$0xff] %v1429
    %1530 = vst [vmem:[#allocation10 + $0x188] sm:$0xff] %v1430
    %1531 = vst [vmem:[#allocation10 + $0x190] sm:$0xff] %v1431
    %1532 = vst [vmem:[#allocation10 + $0x198] sm:$0xff] %v1432
    %1533 = vst [vmem:[#allocation10 + $0x1a0] sm:$0xff] %v1433
    %1534 = vst [vmem:[#allocation10 + $0x1a8] sm:$0xff] %v1434
    %1535 = vst [vmem:[#allocation10 + $0x1b0] sm:$0xff] %v1435
    %1536 = vst [vmem:[#allocation10 + $0x1b8] sm:$0xff] %v1436
    %1537 = vst [vmem:[#allocation10 + $0x1c0] sm:$0xff] %v1437
    %1538 = vst [vmem:[#allocation10 + $0x1c8] sm:$0xff] %v1438
    %1539 = vst [vmem:[#allocation10 + $0x1d0] sm:$0xff] %v1439
    %1540 = vst [vmem:[#allocation10 + $0x1d8] sm:$0xff] %v1440
    %1541 = vst [vmem:[#allocation10 + $0x1e0] sm:$0xff] %v1441
    %1542 = vst [vmem:[#allocation10 + $0x1e8] sm:$0xff] %v1442
    %1543 = vst [vmem:[#allocation10 + $0x1f0] sm:$0xff] %v1443
    %1544 = vst [vmem:[#allocation10 + $0x1f8] sm:$0xff] %v1444
    %1545 = vst [vmem:[#allocation10 + $0x200] sm:$0xff] %v1445
    %1546 = vst [vmem:[#allocation10 + $0x208] sm:$0xff] %v1446
    %1547 = vst [vmem:[#allocation10 + $0x210] sm:$0xff] %v1447
    %1548 = vst [vmem:[#allocation10 + $0x218] sm:$0xff] %v1448
    %1549 = vst [vmem:[#allocation10 + $0x220] sm:$0xff] %v1449
    %1550 = vst [vmem:[#allocation10 + $0x228] sm:$0xff] %v1450
    %1551 = vst [vmem:[#allocation10 + $0x230] sm:$0xff] %v1451
    %1552 = vst [vmem:[#allocation10 + $0x238] sm:$0xff] %v1452
    %1553 = vst [vmem:[#allocation10 + $0x240] sm:$0xff] %v1453
    %1554 = vst [vmem:[#allocation10 + $0x248] sm:$0xff] %v1454
    %1555 = vst [vmem:[#allocation10 + $0x250] sm:$0xff] %v1455
    %1556 = vst [vmem:[#allocation10 + $0x258] sm:$0xff] %v1456
    %1557 = vst [vmem:[#allocation10 + $0x260] sm:$0xff] %v1457
    %1558 = vst [vmem:[#allocation10 + $0x268] sm:$0xff] %v1458
    %1559 = vst [vmem:[#allocation10 + $0x270] sm:$0xff] %v1459
    %1560 = vst [vmem:[#allocation10 + $0x278] sm:$0xff] %v1460
    %1561 = vst [vmem:[#allocation10 + $0x280] sm:$0xff] %v1461
    %1562 = vst [vmem:[#allocation10 + $0x288] sm:$0xff] %v1462
    %1563 = vst [vmem:[#allocation10 + $0x290] sm:$0xff] %v1463
    %1564 = vst [vmem:[#allocation10 + $0x298] sm:$0xff] %v1464
    %1565 = vst [vmem:[#allocation10 + $0x2a0] sm:$0xff] %v1465
    %1566 = vst [vmem:[#allocation10 + $0x2a8] sm:$0xff] %v1466
    %1567 = vst [vmem:[#allocation10 + $0x2b0] sm:$0xff] %v1467
    %1568 = vst [vmem:[#allocation10 + $0x2b8] sm:$0xff] %v1468
    %1569 = vst [vmem:[#allocation10 + $0x2c0] sm:$0xff] %v1469
    %1570 = vst [vmem:[#allocation10 + $0x2c8] sm:$0xff] %v1470
    %1571 = vst [vmem:[#allocation10 + $0x2d0] sm:$0xff] %v1471
    %1572 = vst [vmem:[#allocation10 + $0x2d8] sm:$0xff] %v1472
    %1573 = vst [vmem:[#allocation10 + $0x2e0] sm:$0xff] %v1473
    %1574 = vst [vmem:[#allocation10 + $0x2e8] sm:$0xff] %v1474
    %1575 = vst [vmem:[#allocation10 + $0x2f0] sm:$0xff] %v1475
    %1576 = vst [vmem:[#allocation10 + $0x2f8] sm:$0xff] %v1476
    %1577 = vst [vmem:[#allocation10 + $0x300] sm:$0xf] %v1477
    %1578 = vst [vmem:[#allocation10 + $0x308] sm:$0xf] %v1478
    %1579 = vst [vmem:[#allocation10 + $0x310] sm:$0xf] %v1479
    %1580 = vst [vmem:[#allocation10 + $0x318] sm:$0xf] %v1480
    // Predicated region
    $region34: #{tpu_custom_call.1} parent=1 // pred_check
      _
    $region35: #{tpu_custom_call.1} parent=1 // pred_check_branch
      %1582 = sbr.rel (0) target = $region37
    $region36: #{tpu_custom_call.1} parent=1 // pred_region
      %1584 = vsyncadd [#allocation4], 0
      %s1585 = sshll.u32 [#allocation10], 4
      %s1586 = int_to_ptr.vmem [resolvable:$true] %s1585
      %s1587 = sshll.u32 %s4, 4
      %s1588 = int_to_ptr.hbm [resolvable:$true] %s1587
      %1593 = dma.vmem_to_hbm [thread:$0]  %s1586, 12800, %s1588, [#allocation4], 512, 512, 32
    $region37: #{tpu_custom_call.1} parent=1 // pred_fallthru
      _
    // Predicated region
    $region38: #{tpu_custom_call.1} parent=1 // pred_check
      _
    $region39: #{tpu_custom_call.1} parent=1 // pred_check_branch
      %1595 = sbr.rel (0) target = $region41
    $region40: #{tpu_custom_call.1} parent=1 // pred_region
      %1597 = dma.done [#allocation4], 12800
    $region41: #{tpu_custom_call.1} parent=1 // pred_fallthru
      _
    %1598 = vsyncpa [#allocation3], 1
    %1599 = vsyncpa [#allocation6], 1
    %1600 = vsyncpa [#allocation9], 1
    %1601 = vsyncpa [#allocation4], 1

</llo_original>
